<compile_context>
chip_gen: v6e
topology: v6e:2x2x1
jax: 0.10.0
libtpu: 0.0.40
codegen_flags: <defaults>
</compile_context>

<pallas_src>
import jax
import jax.numpy as jnp
import numpy as np
from jax.experimental import pallas as pl
from jax.experimental.pallas import tpu as pltpu

DIM = 32                  # model feature dim
CODEBOOK_SIZE = 256       # power of 2
CODEBOOK_DIM = 8          # log2(codebook_size)
CODEBOOK_SCALE = 1.0
INV_TEMPERATURE = 100.0
ENTROPY_LOSS_WEIGHT = 0.1
DIVERSITY_GAMMA = 1.0
COMMITMENT_LOSS_WEIGHT = 0.0
TOKEN_TILE = 1024         # tokens per grid step (capped at H*W per image)
LOG_EPS = float(np.log(1e-5))

# float bit-packing of the index is exact only for codebook_dim <= 24
assert CODEBOOK_DIM <= 24


def _lfq_kernel(x_ref, w_in_ref, b_in_ref, w_out_ref, b_out_ref, cb_ref, mask_ref,
                y_ref, idx_ref, psum_ref, esum_ref):
    j = pl.program_id(1)   # token-tile axis within this image ("arbitrary")

    # psum / esum are per-image resident accumulator outputs
    @pl.when(j == 0)
    def _():
        psum_ref[...] = jnp.zeros_like(psum_ref)
        esum_ref[...] = jnp.zeros_like(esum_ref)

    n_tok = x_ref.shape[-1]
    x = x_ref[0].astype(jnp.float32)                                        # [DIM, T]

    # project_in (nn.Linear(dim, codebook_dim)), transposed: c^T = W_in^T x^T + b_in^T
    c = jnp.dot(w_in_ref[...], x, preferred_element_type=jnp.float32) + b_in_ref[...]  # [cd, T]
    pos = c > 0.0

    # lookup-free quantization: sign -> +/- codebook_scale; straight-through forward
    # value is `quantized`, then project_out (nn.Linear(codebook_dim, dim)).
    q = jnp.where(pos, CODEBOOK_SCALE, -CODEBOOK_SCALE).astype(jnp.float32)  # [cd, T]
    y = jnp.dot(w_out_ref[...], q, preferred_element_type=jnp.float32) + b_out_ref[...]  # [DIM, T]
    y_ref[...] = y[None].astype(y_ref.dtype)

    # indices: pack bits with mask = [2^(cd-1), ..., 1]; lane-dense [1, T] row.
    bits = pos.astype(jnp.float32)                                           # [cd, T]
    idx = jnp.sum(bits * mask_ref[...], axis=0, keepdims=True)               # [1, T]
    # TODO(synk): PyTorch returns int64 indices (torch.sum promotion); int32 here.
    idx_ref[...] = idx.astype(jnp.int32)[None]

    # ---- entropy aux-loss statistics ----------------------------------------
    # softmax over the 256 codes factorizes over the 8 independent bits:
    #   logits_k = sum_d s_kd * a_d,  a = 2*tau*c,  Z = prod_d (e^{a_d}+e^{-a_d})
    a = (2.0 * INV_TEMPERATURE) * c                                          # [cd, T]
    abs_a = jnp.abs(a)
    t = jnp.exp(-2.0 * abs_a)                                                # EUP: one [cd,T] exp
    denom = 1.0 + t
    r = pl.reciprocal(denom, approx=True)                                    # EUP, nearly free
    r = r * (2.0 - denom * r)                                                # one Newton step (VPU)
    tr = t * r
    p_pos = jnp.where(a >= 0.0, r, tr)                                       # P(bit_d = +1)
    p_neg = jnp.where(a >= 0.0, tr, r)                                       # P(bit_d = -1)
    logz_d = abs_a + jnp.log(denom)                                          # EUP: one [cd,T] log
    logz = jnp.sum(logz_d, axis=0, keepdims=True)                            # [1, T]

    # p[k, t] = prod_d p_d(s_kd): doubling outer-product build (codes on sublanes),
    # processed from the least-significant bit so each step is a plain concat.
    p = jnp.concatenate([p_neg[CODEBOOK_DIM - 1:], p_pos[CODEBOOK_DIM - 1:]], axis=0)
    for d in range(CODEBOOK_DIM - 2, -1, -1):
        p = jnp.concatenate([p * p_neg[d:d + 1], p * p_pos[d:d + 1]], axis=0)
    # p: [CODEBOOK_SIZE, T], row k == sum_d bit_d * 2^(cd-1-d) (matches codebook rows)

    # log p for the clamped entropy comes off the MXU (K=8 matmul), not the EUP.
    logits = jnp.dot(cb_ref[...], a, preferred_element_type=jnp.float32)     # [CS, T]
    logp_clamped = jnp.maximum(logits - logz, LOG_EPS)                       # == log(max(p,1e-5))

    # sum of probs over tokens (per code) and sum of per-sample entropies.
    # TODO(synk): if the VPU saturates, offload these token-axis reductions to
    # the MXU as p @ ones[T, 1].
    psum_ref[...] += jnp.sum(p, axis=1, keepdims=True)[None]                 # (1, CS, 1)
    ent = p * logp_clamped
    esum_ref[...] += -jnp.sum(jnp.sum(ent, axis=1, keepdims=True),
                              axis=0, keepdims=True)[None]                   # (1, 1, 1)


def init_params(key):
    k1, k2, k3, k4 = jax.random.split(key, 4)
    lim_in = 1.0 / np.sqrt(DIM)
    lim_out = 1.0 / np.sqrt(CODEBOOK_DIM)
    # nn.Linear params stored transposed for the tokens-on-lanes layout
    w_in_t = jax.random.uniform(k1, (CODEBOOK_DIM, DIM), jnp.float32, -lim_in, lim_in)
    b_in_t = jax.random.uniform(k2, (CODEBOOK_DIM, 1), jnp.float32, -lim_in, lim_in)
    w_out_t = jax.random.uniform(k3, (DIM, CODEBOOK_DIM), jnp.float32, -lim_out, lim_out)
    b_out_t = jax.random.uniform(k4, (DIM, 1), jnp.float32, -lim_out, lim_out)

    mask_vals = (2 ** np.arange(CODEBOOK_DIM - 1, -1, -1)).astype(np.int64)   # [128,...,1]
    codes = np.arange(CODEBOOK_SIZE)
    cb_bits = ((codes[:, None] & mask_vals[None, :]) != 0).astype(np.float32)  # [CS, cd]
    codebook = jnp.asarray(cb_bits * 2.0 * CODEBOOK_SCALE - CODEBOOK_SCALE, jnp.float32)
    mask_col = jnp.asarray(mask_vals, jnp.float32).reshape(CODEBOOK_DIM, 1)
    return w_in_t, b_in_t, w_out_t, b_out_t, codebook, mask_col


def lfq_forward(x_nchw, params, token_tile=TOKEN_TILE):
    w_in_t, b_in_t, w_out_t, b_out_t, codebook, mask_col = params
    B, D = x_nchw.shape[0], x_nchw.shape[1]
    assert D == DIM
    spatial = x_nchw.shape[2:]
    hw = int(np.prod(spatial))
    token_tile = min(token_tile, hw)
    assert token_tile % 128 == 0, "token tile must be a multiple of 128 lanes"
    assert hw % token_tile == 0, "pad spatial size to a multiple of token_tile"
    n_tiles = hw // token_tile
    n_tokens = B * hw

    # NCHW is already channel-major: [B, D, H*W] is a free view (no transpose).
    x_flat = x_nchw.reshape(B, D, hw)

    full2d = lambda shape: pl.BlockSpec(shape, lambda b, j: (0, 0))
    out_shapes = (
        jax.ShapeDtypeStruct((B, DIM, hw), x_nchw.dtype),            # quantized (NCHW layout)
        jax.ShapeDtypeStruct((B, 1, hw), jnp.int32),                 # indices
        jax.ShapeDtypeStruct((B, CODEBOOK_SIZE, 1), jnp.float32),    # per-image sum of probs
        jax.ShapeDtypeStruct((B, 1, 1), jnp.float32),                # per-image sum of entropies
    )
    y, idx, psum, esum = pl.pallas_call(
        _lfq_kernel,
        out_shape=out_shapes,
        grid_spec=pltpu.PrefetchScalarGridSpec(
            num_scalar_prefetch=0,
            grid=(B, n_tiles),
            in_specs=[
                pl.BlockSpec((1, DIM, token_tile), lambda b, j: (b, 0, j)),  # x (tokens on lanes)
                full2d((CODEBOOK_DIM, DIM)),        # w_in^T
                full2d((CODEBOOK_DIM, 1)),          # b_in^T
                full2d((DIM, CODEBOOK_DIM)),        # w_out^T
                full2d((DIM, 1)),                   # b_out^T
                full2d((CODEBOOK_SIZE, CODEBOOK_DIM)),  # codebook (+/-1 rows)
                full2d((CODEBOOK_DIM, 1)),          # bit mask column
            ],
            out_specs=[
                pl.BlockSpec((1, DIM, token_tile), lambda b, j: (b, 0, j)),
                pl.BlockSpec((1, 1, token_tile), lambda b, j: (b, 0, j)),
                pl.BlockSpec((1, CODEBOOK_SIZE, 1), lambda b, j: (b, 0, 0)),
                pl.BlockSpec((1, 1, 1), lambda b, j: (b, 0, 0)),
            ],
        ),
        compiler_params=pltpu.CompilerParams(
            dimension_semantics=("parallel", "arbitrary"),
            vmem_limit_bytes=32 * 1024 * 1024),
    )(x_flat, w_in_t, b_in_t, w_out_t, b_out_t, codebook, mask_col)

    # reassemble outputs (reshape-only glue, no transposes)
    quantized = y.reshape(x_nchw.shape)
    indices = idx.reshape((B,) + spatial)

    per_sample_entropy = jnp.sum(esum) / n_tokens
    avg_prob = jnp.sum(psum, axis=0).reshape(CODEBOOK_SIZE) / n_tokens
    codebook_entropy = jnp.sum(-avg_prob * jnp.log(jnp.maximum(avg_prob, 1e-5)))
    entropy_aux_loss = per_sample_entropy - DIVERSITY_GAMMA * codebook_entropy
    aux_loss = (entropy_aux_loss * ENTROPY_LOSS_WEIGHT
                + 0.0 * COMMITMENT_LOSS_WEIGHT)    # commitment weight = 0 -> zero
    return quantized, indices, aux_loss


def _reference(x_nchw, params):
    """Pure-JAX reference mirroring the PyTorch training-mode forward (unfactorized math)."""
    w_in_t, b_in_t, w_out_t, b_out_t, codebook, mask_col = params
    B, D = x_nchw.shape[0], x_nchw.shape[1]
    spatial = x_nchw.shape[2:]
    hp = jax.lax.Precision.HIGHEST
    x = jnp.moveaxis(x_nchw, 1, -1).reshape(-1, D)                    # [N, D] tokens
    c = jnp.dot(x, w_in_t.T, precision=hp) + b_in_t.reshape(1, -1)
    q = jnp.where(c > 0, CODEBOOK_SCALE, -CODEBOOK_SCALE)
    idx = jnp.sum((c > 0).astype(jnp.int32) * mask_col.reshape(1, -1).astype(jnp.int32), axis=-1)
    y = jnp.dot(q, w_out_t.T, precision=hp) + b_out_t.reshape(1, -1)
    logits = 2.0 * INV_TEMPERATURE * jnp.dot(c, codebook.T, precision=hp)
    p = jax.nn.softmax(logits, axis=-1)
    pse = jnp.mean(jnp.sum(-p * jnp.log(jnp.maximum(p, 1e-5)), axis=-1))
    avg_p = jnp.mean(p, axis=0)
    cbe = jnp.sum(-avg_p * jnp.log(jnp.maximum(avg_p, 1e-5)))
    aux = (pse - DIVERSITY_GAMMA * cbe) * ENTROPY_LOSS_WEIGHT
    quantized = jnp.moveaxis(y.reshape((B,) + spatial + (D,)), -1, 1)
    return quantized, idx.reshape((B,) + spatial), aux


if __name__ == "__main__":
    key = jax.random.PRNGKey(0)
    pkey, xkey = jax.random.split(key)
    params = init_params(pkey)
    # 2 images of 16x16 -> 256 tokens each; token_tile=128 exercises both grid
    # axes (per-image accumulation over 2 tiles, and the parallel batch axis).
    x = jax.random.normal(xkey, (2, DIM, 16, 16), jnp.float32)

    fwd = jax.jit(lfq_forward, static_argnames=("token_tile",))
    quantized, indices, aux_loss = jax.block_until_ready(fwd(x, params, token_tile=128))

    ref_q, ref_idx, ref_aux = _reference(x, params)
    np.testing.assert_allclose(np.asarray(quantized), np.asarray(ref_q), rtol=1e-4, atol=1e-4)
    np.testing.assert_array_equal(np.asarray(indices), np.asarray(ref_idx))
    # factorized softmax + approx reciprocal reassociate a few float ops vs the reference
    np.testing.assert_allclose(float(aux_loss), float(ref_aux), rtol=2e-3, atol=2e-4)

    print("KERNEL_OK")
</pallas_src>

<mosaic_0001>
module attributes {stable_mosaic.version = 11 : i64} {
  func.func @_lfq_kernel(%arg0: i32, %arg1: i32, %arg2: memref<1x32x128xf32, #tpu.memory_space<vmem>>, %arg3: memref<8x32xf32, #tpu.memory_space<vmem>>, %arg4: memref<8x1xf32, #tpu.memory_space<vmem>>, %arg5: memref<32x8xf32, #tpu.memory_space<vmem>>, %arg6: memref<32x1xf32, #tpu.memory_space<vmem>>, %arg7: memref<256x8xf32, #tpu.memory_space<vmem>>, %arg8: memref<8x1xf32, #tpu.memory_space<vmem>>, %arg9: memref<1x32x128xf32, #tpu.memory_space<vmem>>, %arg10: memref<1x1x128xi32, #tpu.memory_space<vmem>>, %arg11: memref<1x256x1xf32, #tpu.memory_space<vmem>>, %arg12: memref<1x1x1xf32, #tpu.memory_space<vmem>>) attributes {dimension_semantics = [#tpu.dimension_semantics<parallel>, #tpu.dimension_semantics<arbitrary>], iteration_bounds = array<i64: 2, 2>, scalar_prefetch = 0 : i64, scratch_operands = 0 : i64, tpu.core_type = #tpu.core_type<tc>, window_params = [{transform_indices = @transform_0, window_bounds = array<i64: 1, 32, 128>}, {pipeline_mode = #tpu.pipeline_mode<synchronous>, transform_indices = @transform_1, window_bounds = array<i64: 8, 32>}, {pipeline_mode = #tpu.pipeline_mode<synchronous>, transform_indices = @transform_2, window_bounds = array<i64: 8, 1>}, {pipeline_mode = #tpu.pipeline_mode<synchronous>, transform_indices = @transform_3, window_bounds = array<i64: 32, 8>}, {pipeline_mode = #tpu.pipeline_mode<synchronous>, transform_indices = @transform_4, window_bounds = array<i64: 32, 1>}, {pipeline_mode = #tpu.pipeline_mode<synchronous>, transform_indices = @transform_5, window_bounds = array<i64: 256, 8>}, {pipeline_mode = #tpu.pipeline_mode<synchronous>, transform_indices = @transform_6, window_bounds = array<i64: 8, 1>}, {transform_indices = @transform_7, window_bounds = array<i64: 1, 32, 128>}, {transform_indices = @transform_8, window_bounds = array<i64: 1, 1, 128>}, {transform_indices = @transform_9, window_bounds = array<i64: 1, 256, 1>}, {transform_indices = @transform_10, window_bounds = array<i64: 1, 1, 1>}]} {
    %c0_i32 = arith.constant 0 : i32
    %0 = arith.cmpi eq, %arg1, %c0_i32 : i32
    %1 = arith.extui %0 : i1 to i32
    %c0_i32_0 = arith.constant 0 : i32
    %2 = arith.cmpi ne, %1, %c0_i32_0 : i32
    scf.if %2 {
      %cst_51 = arith.constant 0.000000e+00 : f32
      %131 = vector.broadcast %cst_51 : f32 to vector<1x256x1xf32>
      %c0_52 = arith.constant 0 : index
      %c0_53 = arith.constant 0 : index
      %c0_54 = arith.constant 0 : index
      %132 = vector.load %arg11[%c0_52, %c0_53, %c0_54] : memref<1x256x1xf32, #tpu.memory_space<vmem>>, vector<1x256x1xf32>
      tpu.vector_store %arg11[%c0_52, %c0_53, %c0_54], %131 {strides = array<i32>} : memref<1x256x1xf32, #tpu.memory_space<vmem>>, vector<1x256x1xf32>,
      %cst_55 = arith.constant 0.000000e+00 : f32
      %133 = vector.broadcast %cst_55 : f32 to vector<1x1x1xf32>
      %c0_56 = arith.constant 0 : index
      %c0_57 = arith.constant 0 : index
      %c0_58 = arith.constant 0 : index
      %134 = vector.load %arg12[%c0_56, %c0_57, %c0_58] : memref<1x1x1xf32, #tpu.memory_space<vmem>>, vector<1x1x1xf32>
      tpu.vector_store %arg12[%c0_56, %c0_57, %c0_58], %133 {strides = array<i32>} : memref<1x1x1xf32, #tpu.memory_space<vmem>>, vector<1x1x1xf32>,
    } else {
    }
    %c0 = arith.constant 0 : index
    %c0_1 = arith.constant 0 : index
    %c0_2 = arith.constant 0 : index
    %3 = vector.load %arg2[%c0, %c0_1, %c0_2] : memref<1x32x128xf32, #tpu.memory_space<vmem>>, vector<1x32x128xf32>
    %4 = vector.shape_cast %3 : vector<1x32x128xf32> to vector<32x128xf32>
    %c0_3 = arith.constant 0 : index
    %c0_4 = arith.constant 0 : index
    %5 = vector.load %arg3[%c0_3, %c0_4] : memref<8x32xf32, #tpu.memory_space<vmem>>, vector<8x32xf32>
    %cst = arith.constant dense<0.000000e+00> : vector<8x128xf32>
    %6 = tpu.matmul %5, %4, %cst {dimension_numbers = #tpu.dot_dimension_numbers<[1], [0], [0], [1], [0, 0, 1, 1], [], []>} : vector<8x32xf32>, vector<32x128xf32>, vector<8x128xf32> -> vector<8x128xf32>
    %c0_5 = arith.constant 0 : index
    %c0_6 = arith.constant 0 : index
    %7 = vector.load %arg4[%c0_5, %c0_6] : memref<8x1xf32, #tpu.memory_space<vmem>>, vector<8x1xf32>
    %8 = vector.broadcast %7 : vector<8x1xf32> to vector<8x128xf32>
    %9 = arith.addf %6, %8 : vector<8x128xf32>
    %cst_7 = arith.constant 0.000000e+00 : f32
    %10 = vector.broadcast %cst_7 : f32 to vector<8x128xf32>
    %11 = arith.cmpf ogt, %9, %10 : vector<8x128xf32>
    %cst_8 = arith.constant 1.000000e+00 : f32
    %cst_9 = arith.constant -1.000000e+00 : f32
    %12 = vector.broadcast %cst_8 : f32 to vector<8x128xf32>
    %13 = vector.broadcast %cst_9 : f32 to vector<8x128xf32>
    %14 = arith.select %11, %12, %13 : vector<8x128xi1>, vector<8x128xf32>
    %c0_10 = arith.constant 0 : index
    %c0_11 = arith.constant 0 : index
    %15 = vector.load %arg5[%c0_10, %c0_11] : memref<32x8xf32, #tpu.memory_space<vmem>>, vector<32x8xf32>
    %cst_12 = arith.constant dense<0.000000e+00> : vector<32x128xf32>
    %16 = tpu.matmul %15, %14, %cst_12 {dimension_numbers = #tpu.dot_dimension_numbers<[1], [0], [0], [1], [0, 0, 1, 1], [], []>} : vector<32x8xf32>, vector<8x128xf32>, vector<32x128xf32> -> vector<32x128xf32>
    %c0_13 = arith.constant 0 : index
    %c0_14 = arith.constant 0 : index
    %17 = vector.load %arg6[%c0_13, %c0_14] : memref<32x1xf32, #tpu.memory_space<vmem>>, vector<32x1xf32>
    %18 = vector.broadcast %17 : vector<32x1xf32> to vector<32x128xf32>
    %19 = arith.addf %16, %18 : vector<32x128xf32>
    %20 = vector.shape_cast %19 : vector<32x128xf32> to vector<1x32x128xf32>
    %c0_15 = arith.constant 0 : index
    %c0_16 = arith.constant 0 : index
    %c0_17 = arith.constant 0 : index
    %21 = vector.load %arg9[%c0_15, %c0_16, %c0_17] : memref<1x32x128xf32, #tpu.memory_space<vmem>>, vector<1x32x128xf32>
    tpu.vector_store %arg9[%c0_15, %c0_16, %c0_17], %20 {strides = array<i32>} : memref<1x32x128xf32, #tpu.memory_space<vmem>>, vector<1x32x128xf32>,
    %22 = arith.extui %11 : vector<8x128xi1> to vector<8x128xi32>
    %23 = arith.sitofp %22 : vector<8x128xi32> to vector<8x128xf32>
    %c0_18 = arith.constant 0 : index
    %c0_19 = arith.constant 0 : index
    %24 = vector.load %arg8[%c0_18, %c0_19] : memref<8x1xf32, #tpu.memory_space<vmem>>, vector<8x1xf32>
    %25 = vector.broadcast %24 : vector<8x1xf32> to vector<8x128xf32>
    %26 = arith.mulf %23, %25 : vector<8x128xf32>
    %cst_20 = arith.constant dense<0.000000e+00> : vector<128xf32>
    %27 = vector.multi_reduction <add>, %26, %cst_20 [0] : vector<8x128xf32> to vector<128xf32>
    %28 = vector.shape_cast %27 : vector<128xf32> to vector<1x128xf32>
    %29 = arith.fptosi %28 : vector<1x128xf32> to vector<1x128xi32>
    %30 = vector.shape_cast %29 : vector<1x128xi32> to vector<1x1x128xi32>
    %c0_21 = arith.constant 0 : index
    %c0_22 = arith.constant 0 : index
    %c0_23 = arith.constant 0 : index
    %31 = vector.load %arg10[%c0_21, %c0_22, %c0_23] : memref<1x1x128xi32, #tpu.memory_space<vmem>>, vector<1x1x128xi32>
    tpu.vector_store %arg10[%c0_21, %c0_22, %c0_23], %30 {strides = array<i32>} : memref<1x1x128xi32, #tpu.memory_space<vmem>>, vector<1x1x128xi32>,
    %cst_24 = arith.constant 2.000000e+02 : f32
    %32 = vector.broadcast %cst_24 : f32 to vector<8x128xf32>
    %33 = arith.mulf %32, %9 : vector<8x128xf32>
    %34 = math.absf %33 : vector<8x128xf32>
    %cst_25 = arith.constant -2.000000e+00 : f32
    %35 = vector.broadcast %cst_25 : f32 to vector<8x128xf32>
    %36 = arith.mulf %35, %34 : vector<8x128xf32>
    %37 = math.exp %36 : vector<8x128xf32>
    %cst_26 = arith.constant 1.000000e+00 : f32
    %38 = vector.broadcast %cst_26 : f32 to vector<8x128xf32>
    %39 = arith.addf %38, %37 : vector<8x128xf32>
    %40 = tpu.reciprocal %39 {approx = true} : vector<8x128xf32> -> vector<8x128xf32>
    %41 = arith.mulf %39, %40 : vector<8x128xf32>
    %cst_27 = arith.constant 2.000000e+00 : f32
    %42 = vector.broadcast %cst_27 : f32 to vector<8x128xf32>
    %43 = arith.subf %42, %41 : vector<8x128xf32>
    %44 = arith.mulf %40, %43 : vector<8x128xf32>
    %45 = arith.mulf %37, %44 : vector<8x128xf32>
    %cst_28 = arith.constant 0.000000e+00 : f32
    %46 = vector.broadcast %cst_28 : f32 to vector<8x128xf32>
    %47 = arith.cmpf oge, %33, %46 : vector<8x128xf32>
    %48 = arith.select %47, %44, %45 : vector<8x128xi1>, vector<8x128xf32>
    %cst_29 = arith.constant 0.000000e+00 : f32
    %49 = vector.broadcast %cst_29 : f32 to vector<8x128xf32>
    %50 = arith.cmpf oge, %33, %49 : vector<8x128xf32>
    %51 = arith.select %50, %45, %44 : vector<8x128xi1>, vector<8x128xf32>
    %52 = math.log %39 : vector<8x128xf32>
    %53 = arith.addf %34, %52 : vector<8x128xf32>
    %cst_30 = arith.constant dense<0.000000e+00> : vector<128xf32>
    %54 = vector.multi_reduction <add>, %53, %cst_30 [0] : vector<8x128xf32> to vector<128xf32>
    %55 = vector.shape_cast %54 : vector<128xf32> to vector<1x128xf32>
    %56 = vector.extract_strided_slice %51 {offsets = [7, 0], sizes = [1, 128], strides = [1, 1]} : vector<8x128xf32> to vector<1x128xf32>
    %57 = vector.extract_strided_slice %48 {offsets = [7, 0], sizes = [1, 128], strides = [1, 1]} : vector<8x128xf32> to vector<1x128xf32>
    %58 = tpu.concatenate %56, %57 in 0 : vector<1x128xf32>, vector<1x128xf32> -> vector<2x128xf32>
    %59 = vector.extract_strided_slice %51 {offsets = [6, 0], sizes = [1, 128], strides = [1, 1]} : vector<8x128xf32> to vector<1x128xf32>
    %60 = vector.broadcast %59 : vector<1x128xf32> to vector<2x128xf32>
    %61 = arith.mulf %58, %60 : vector<2x128xf32>
    %62 = vector.extract_strided_slice %48 {offsets = [6, 0], sizes = [1, 128], strides = [1, 1]} : vector<8x128xf32> to vector<1x128xf32>
    %63 = vector.broadcast %62 : vector<1x128xf32> to vector<2x128xf32>
    %64 = arith.mulf %58, %63 : vector<2x128xf32>
    %65 = tpu.concatenate %61, %64 in 0 : vector<2x128xf32>, vector<2x128xf32> -> vector<4x128xf32>
    %66 = vector.extract_strided_slice %51 {offsets = [5, 0], sizes = [1, 128], strides = [1, 1]} : vector<8x128xf32> to vector<1x128xf32>
    %67 = vector.broadcast %66 : vector<1x128xf32> to vector<4x128xf32>
    %68 = arith.mulf %65, %67 : vector<4x128xf32>
    %69 = vector.extract_strided_slice %48 {offsets = [5, 0], sizes = [1, 128], strides = [1, 1]} : vector<8x128xf32> to vector<1x128xf32>
    %70 = vector.broadcast %69 : vector<1x128xf32> to vector<4x128xf32>
    %71 = arith.mulf %65, %70 : vector<4x128xf32>
    %72 = tpu.concatenate %68, %71 in 0 : vector<4x128xf32>, vector<4x128xf32> -> vector<8x128xf32>
    %73 = vector.extract_strided_slice %51 {offsets = [4, 0], sizes = [1, 128], strides = [1, 1]} : vector<8x128xf32> to vector<1x128xf32>
    %74 = vector.broadcast %73 : vector<1x128xf32> to vector<8x128xf32>
    %75 = arith.mulf %72, %74 : vector<8x128xf32>
    %76 = vector.extract_strided_slice %48 {offsets = [4, 0], sizes = [1, 128], strides = [1, 1]} : vector<8x128xf32> to vector<1x128xf32>
    %77 = vector.broadcast %76 : vector<1x128xf32> to vector<8x128xf32>
    %78 = arith.mulf %72, %77 : vector<8x128xf32>
    %79 = tpu.concatenate %75, %78 in 0 : vector<8x128xf32>, vector<8x128xf32> -> vector<16x128xf32>
    %80 = vector.extract_strided_slice %51 {offsets = [3, 0], sizes = [1, 128], strides = [1, 1]} : vector<8x128xf32> to vector<1x128xf32>
    %81 = vector.broadcast %80 : vector<1x128xf32> to vector<16x128xf32>
    %82 = arith.mulf %79, %81 : vector<16x128xf32>
    %83 = vector.extract_strided_slice %48 {offsets = [3, 0], sizes = [1, 128], strides = [1, 1]} : vector<8x128xf32> to vector<1x128xf32>
    %84 = vector.broadcast %83 : vector<1x128xf32> to vector<16x128xf32>
    %85 = arith.mulf %79, %84 : vector<16x128xf32>
    %86 = tpu.concatenate %82, %85 in 0 : vector<16x128xf32>, vector<16x128xf32> -> vector<32x128xf32>
    %87 = vector.extract_strided_slice %51 {offsets = [2, 0], sizes = [1, 128], strides = [1, 1]} : vector<8x128xf32> to vector<1x128xf32>
    %88 = vector.broadcast %87 : vector<1x128xf32> to vector<32x128xf32>
    %89 = arith.mulf %86, %88 : vector<32x128xf32>
    %90 = vector.extract_strided_slice %48 {offsets = [2, 0], sizes = [1, 128], strides = [1, 1]} : vector<8x128xf32> to vector<1x128xf32>
    %91 = vector.broadcast %90 : vector<1x128xf32> to vector<32x128xf32>
    %92 = arith.mulf %86, %91 : vector<32x128xf32>
    %93 = tpu.concatenate %89, %92 in 0 : vector<32x128xf32>, vector<32x128xf32> -> vector<64x128xf32>
    %94 = vector.extract_strided_slice %51 {offsets = [1, 0], sizes = [1, 128], strides = [1, 1]} : vector<8x128xf32> to vector<1x128xf32>
    %95 = vector.broadcast %94 : vector<1x128xf32> to vector<64x128xf32>
    %96 = arith.mulf %93, %95 : vector<64x128xf32>
    %97 = vector.extract_strided_slice %48 {offsets = [1, 0], sizes = [1, 128], strides = [1, 1]} : vector<8x128xf32> to vector<1x128xf32>
    %98 = vector.broadcast %97 : vector<1x128xf32> to vector<64x128xf32>
    %99 = arith.mulf %93, %98 : vector<64x128xf32>
    %100 = tpu.concatenate %96, %99 in 0 : vector<64x128xf32>, vector<64x128xf32> -> vector<128x128xf32>
    %101 = vector.extract_strided_slice %51 {offsets = [0, 0], sizes = [1, 128], strides = [1, 1]} : vector<8x128xf32> to vector<1x128xf32>
    %102 = vector.broadcast %101 : vector<1x128xf32> to vector<128x128xf32>
    %103 = arith.mulf %100, %102 : vector<128x128xf32>
    %104 = vector.extract_strided_slice %48 {offsets = [0, 0], sizes = [1, 128], strides = [1, 1]} : vector<8x128xf32> to vector<1x128xf32>
    %105 = vector.broadcast %104 : vector<1x128xf32> to vector<128x128xf32>
    %106 = arith.mulf %100, %105 : vector<128x128xf32>
    %107 = tpu.concatenate %103, %106 in 0 : vector<128x128xf32>, vector<128x128xf32> -> vector<256x128xf32>
    %c0_31 = arith.constant 0 : index
    %c0_32 = arith.constant 0 : index
    %108 = vector.load %arg7[%c0_31, %c0_32] : memref<256x8xf32, #tpu.memory_space<vmem>>, vector<256x8xf32>
    %cst_33 = arith.constant dense<0.000000e+00> : vector<256x128xf32>
    %109 = tpu.matmul %108, %33, %cst_33 {dimension_numbers = #tpu.dot_dimension_numbers<[1], [0], [0], [1], [0, 0, 1, 1], [], []>} : vector<256x8xf32>, vector<8x128xf32>, vector<256x128xf32> -> vector<256x128xf32>
    %110 = vector.broadcast %55 : vector<1x128xf32> to vector<256x128xf32>
    %111 = arith.subf %109, %110 : vector<256x128xf32>
    %cst_34 = arith.constant -11.5129251 : f32
    %112 = vector.broadcast %cst_34 : f32 to vector<256x128xf32>
    %113 = arith.maximumf %111, %112 : vector<256x128xf32>
    %c0_35 = arith.constant 0 : index
    %c0_36 = arith.constant 0 : index
    %c0_37 = arith.constant 0 : index
    %114 = vector.load %arg11[%c0_35, %c0_36, %c0_37] : memref<1x256x1xf32, #tpu.memory_space<vmem>>, vector<1x256x1xf32>
    %cst_38 = arith.constant dense<0.000000e+00> : vector<256xf32>
    %115 = vector.multi_reduction <add>, %107, %cst_38 [1] : vector<256x128xf32> to vector<256xf32>
    %116 = vector.shape_cast %115 : vector<256xf32> to vector<256x1xf32>
    %117 = vector.shape_cast %116 : vector<256x1xf32> to vector<1x256x1xf32>
    %118 = arith.addf %114, %117 : vector<1x256x1xf32>
    %c0_39 = arith.constant 0 : index
    %c0_40 = arith.constant 0 : index
    %c0_41 = arith.constant 0 : index
    %119 = vector.load %arg11[%c0_39, %c0_40, %c0_41] : memref<1x256x1xf32, #tpu.memory_space<vmem>>, vector<1x256x1xf32>
    tpu.vector_store %arg11[%c0_39, %c0_40, %c0_41], %118 {strides = array<i32>} : memref<1x256x1xf32, #tpu.memory_space<vmem>>, vector<1x256x1xf32>,
    %120 = arith.mulf %107, %113 : vector<256x128xf32>
    %c0_42 = arith.constant 0 : index
    %c0_43 = arith.constant 0 : index
    %c0_44 = arith.constant 0 : index
    %121 = vector.load %arg12[%c0_42, %c0_43, %c0_44] : memref<1x1x1xf32, #tpu.memory_space<vmem>>, vector<1x1x1xf32>
    %cst_45 = arith.constant dense<0.000000e+00> : vector<256xf32>
    %122 = vector.multi_reduction <add>, %120, %cst_45 [1] : vector<256x128xf32> to vector<256xf32>
    %123 = vector.shape_cast %122 : vector<256xf32> to vector<256x1xf32>
    %cst_46 = arith.constant dense<0.000000e+00> : vector<1xf32>
    %124 = vector.multi_reduction <add>, %123, %cst_46 [0] : vector<256x1xf32> to vector<1xf32>
    %125 = vector.shape_cast %124 : vector<1xf32> to vector<1x1xf32>
    %126 = vector.shape_cast %125 : vector<1x1xf32> to vector<1x1x1xf32>
    %cst_47 = arith.constant 0.000000e+00 : f32
    %127 = vector.broadcast %cst_47 : f32 to vector<1x1x1xf32>
    %128 = arith.subf %127, %126 : vector<1x1x1xf32>
    %129 = arith.addf %121, %128 : vector<1x1x1xf32>
    %c0_48 = arith.constant 0 : index
    %c0_49 = arith.constant 0 : index
    %c0_50 = arith.constant 0 : index
    %130 = vector.load %arg12[%c0_48, %c0_49, %c0_50] : memref<1x1x1xf32, #tpu.memory_space<vmem>>, vector<1x1x1xf32>
    tpu.vector_store %arg12[%c0_48, %c0_49, %c0_50], %129 {strides = array<i32>} : memref<1x1x1xf32, #tpu.memory_space<vmem>>, vector<1x1x1xf32>,
    return
  }
  func.func @transform_0(%arg0: i32, %arg1: i32) -> (i32, i32, i32) {
    %c0_i32 = arith.constant 0 : i32
    %c0_i32_0 = arith.constant 0 : i32
    return %arg0, %c0_i32, %arg1 : i32, i32, i32
  }
  func.func @transform_1(%arg0: i32, %arg1: i32) -> (i32, i32) {
    %c0_i32 = arith.constant 0 : i32
    %c0_i32_0 = arith.constant 0 : i32
    %c0_i32_1 = arith.constant 0 : i32
    return %c0_i32, %c0_i32_0 : i32, i32
  }
  func.func @transform_2(%arg0: i32, %arg1: i32) -> (i32, i32) {
    %c0_i32 = arith.constant 0 : i32
    %c0_i32_0 = arith.constant 0 : i32
    %c0_i32_1 = arith.constant 0 : i32
    return %c0_i32, %c0_i32_0 : i32, i32
  }
  func.func @transform_3(%arg0: i32, %arg1: i32) -> (i32, i32) {
    %c0_i32 = arith.constant 0 : i32
    %c0_i32_0 = arith.constant 0 : i32
    %c0_i32_1 = arith.constant 0 : i32
    return %c0_i32, %c0_i32_0 : i32, i32
  }
  func.func @transform_4(%arg0: i32, %arg1: i32) -> (i32, i32) {
    %c0_i32 = arith.constant 0 : i32
    %c0_i32_0 = arith.constant 0 : i32
    %c0_i32_1 = arith.constant 0 : i32
    return %c0_i32, %c0_i32_0 : i32, i32
  }
  func.func @transform_5(%arg0: i32, %arg1: i32) -> (i32, i32) {
    %c0_i32 = arith.constant 0 : i32
    %c0_i32_0 = arith.constant 0 : i32
    %c0_i32_1 = arith.constant 0 : i32
    return %c0_i32, %c0_i32_0 : i32, i32
  }
  func.func @transform_6(%arg0: i32, %arg1: i32) -> (i32, i32) {
    %c0_i32 = arith.constant 0 : i32
    %c0_i32_0 = arith.constant 0 : i32
    %c0_i32_1 = arith.constant 0 : i32
    return %c0_i32, %c0_i32_0 : i32, i32
  }
  func.func @transform_7(%arg0: i32, %arg1: i32) -> (i32, i32, i32) {
    %c0_i32 = arith.constant 0 : i32
    %c0_i32_0 = arith.constant 0 : i32
    return %arg0, %c0_i32, %arg1 : i32, i32, i32
  }
  func.func @transform_8(%arg0: i32, %arg1: i32) -> (i32, i32, i32) {
    %c0_i32 = arith.constant 0 : i32
    %c0_i32_0 = arith.constant 0 : i32
    return %arg0, %c0_i32, %arg1 : i32, i32, i32
  }
  func.func @transform_9(%arg0: i32, %arg1: i32) -> (i32, i32, i32) {
    %c0_i32 = arith.constant 0 : i32
    %c0_i32_0 = arith.constant 0 : i32
    %c0_i32_1 = arith.constant 0 : i32
    return %arg0, %c0_i32, %c0_i32_0 : i32, i32, i32
  }
  func.func @transform_10(%arg0: i32, %arg1: i32) -> (i32, i32, i32) {
    %c0_i32 = arith.constant 0 : i32
    %c0_i32_0 = arith.constant 0 : i32
    %c0_i32_1 = arith.constant 0 : i32
    return %arg0, %c0_i32, %c0_i32_0 : i32, i32, i32
  }
}

</mosaic_0001>

<llo_original>
// kernel: lfq_forward.1
$region0: #{lfq_forward.1}
  #allocation0 [shape = 'u32[]', space=smem, size = 0x4, offset = 0x4, fixed_abs, tag = 'smem constant byte address 0x4 - core index']
  #allocation1 [shape = 'u32[144,128]{1,0:T(1,128)}', space=vmem, size = 0x12000, scoped, tag = 'internal scratch']
  %s0 = inlined_call_operand.vmem [shape: f32[2,32,256], index: 0, kind: input, shape index: {}]
  %s1 = inlined_call_operand.vmem [shape: f32[8,32], index: 1, kind: input, shape index: {}]
  %s2 = inlined_call_operand.vmem [shape: f32[8,1], index: 2, kind: input, shape index: {}]
  %s3 = inlined_call_operand.vmem [shape: f32[32,8], index: 3, kind: input, shape index: {}]
  %s4 = inlined_call_operand.vmem [shape: f32[32,1], index: 4, kind: input, shape index: {}]
  %s5 = inlined_call_operand.vmem [shape: f32[256,8], index: 5, kind: input, shape index: {}]
  %s6 = inlined_call_operand.vmem [shape: f32[8,1], index: 6, kind: input, shape index: {}]
  %s7 = inlined_call_operand.vmem [shape: f32[2,32,256], index: 7, kind: output, shape index: {0}]
  %s8 = inlined_call_operand.vmem [shape: s32[2,1,256], index: 8, kind: output, shape index: {1}]
  %s9 = inlined_call_operand.vmem [shape: f32[2,256,1], index: 9, kind: output, shape index: {2}]
  %s10 = inlined_call_operand.vmem [shape: f32[2,1,1], index: 10, kind: output, shape index: {3}]
  %11 = xla_tuple %s7, %s8, %s9, %s10
  %s12 = sld [smem:[#allocation0]]
  $region161: #{lfq_forward.1} parent=0
    _
  %s14 = ssub.s32 1, %s12
  %s15 = scalar_select 0, %s14, %s12
  $region1: #{lfq_forward.1} parent=0
    #allocation2 [shape = 'u8[32768]{0}', space=vmem, size = 0x8000, scoped, tag = 'input window, operand 0']
    #allocation3 [shape = 'u8[32768]{0}', space=vmem, size = 0x8000, scoped, tag = 'output window, operand 0']
    loop: start=0, step=1, limit=6
    $region2: #{lfq_forward.1} parent=1 // loop_pre_header
      _
    $region3: #{lfq_forward.1} parent=1 // loop_header
      %s17 = sphi 0, %s21
      %p18 = scmp.ge.s32.totalorder %s17, 6
      %s24 = sphi 0, %s36
      %s25 = sphi 0, %s32
      %s26 = sphi 0, %s24
      %s27 = sphi 0, %s25
      %s28 = sphi 0, %s26
      %s29 = sphi 0, %s27
      %s41 = sphi 0, %s43
      %s44 = sphi 0, %s41
      %s45 = sphi 0, %s44
      %s61 = sphi 0, %s45
      %s65 = sphi 0, %s65
      %s67 = sphi 0, %s65
      %s68 = sphi 0, %s67
      %s82 = sphi 0, %s68
      %s86 = sphi 0, %s86
      %s88 = sphi 0, %s86
      %s89 = sphi 0, %s88
      %s103 = sphi 0, %s89
      %s107 = sphi 0, %s107
      %s109 = sphi 0, %s107
      %s110 = sphi 0, %s109
      %s124 = sphi 0, %s110
      %s128 = sphi 0, %s128
      %s130 = sphi 0, %s128
      %s131 = sphi 0, %s130
      %s145 = sphi 0, %s131
      %s149 = sphi 0, %s149
      %s151 = sphi 0, %s149
      %s152 = sphi 0, %s151
      %s166 = sphi 0, %s152
      %s170 = sphi 0, %s170
      %s172 = sphi 0, %s170
      %s173 = sphi 0, %s172
      %s187 = sphi 0, %s173
      %s195 = sphi 0, %s197
      %s198 = sphi 0, %s195
      %s199 = sphi 0, %s198
      %s215 = sphi 0, %s199
      %s223 = sphi 0, %s225
      %s226 = sphi 0, %s223
      %s227 = sphi 0, %s226
      %s243 = sphi 0, %s227
      %s249 = sphi 0, %s251
      %s252 = sphi 0, %s249
      %s253 = sphi 0, %s252
      %s269 = sphi 0, %s253
      %s275 = sphi 0, %s277
      %s278 = sphi 0, %s275
      %s279 = sphi 0, %s278
      %s295 = sphi 0, %s279
    $region4: #{lfq_forward.1} parent=1 // loop_header_branch
      %20 = sbr.rel (%p18) target = $region8
    $region5: #{lfq_forward.1} parent=1 // loop_body
      %s22 = ssub.s32 %s17, 1
      %s23 = ssub.s32 %s17, 2
      %s30 = sadd.s32 1, %s25
      %p31 = scmp.ge.s32.totalorder %s30, 2
      %s32 = scalar_select %p31, 0, %s30
      %s33 = sadd.s32 1, %s24
      %s34 = scalar_select %p31, %s33, %s24
      %p35 = scmp.ge.s32.totalorder %s34, 2
      %s36 = scalar_select %p35, 0, %s34
      %s37 = ssub.s32 %s24, %s36
      %s38 = ssub.s32 %s25, %s32
      %s39 = sor.u32 %s37, %s38
      %p40 = scmp.eq.s32.totalorder %s39, 0
      %s42 = sadd.s32 %s41, 1
      %s43 = scalar_select %p40, %s41, %s42
      %p46 = pneg %p40
      %p47 = scmp.eq.s32.totalorder %s17, 3
      %p48 = por %p46, %p47
      %p49 = scmp.ne.s32.totalorder %s41, %s44
      %p50 = scmp.eq.s32.totalorder %s17, 0
      %p51 = por %p49, %p50
      %p52 = scmp.ne.s32.totalorder %s41, %s44
      %p53 = scmp.eq.s32.totalorder %s22, 3
      %p54 = por %p52, %p53
      %p55 = scmp.ne.s32.totalorder %s44, %s45
      %p56 = scmp.eq.s32.totalorder %s22, 0
      %p57 = por %p55, %p56
      %p58 = scmp.ne.s32.totalorder %s44, %s45
      %p59 = scmp.eq.s32.totalorder %s23, 3
      %p60 = por %p58, %p59
      %p62 = scmp.ne.s32.totalorder %s45, %s61
      %p63 = scmp.eq.s32.totalorder %s23, 0
      %p64 = por %p62, %p63
      %s66 = sadd.s32 %s65, 1
      %p69 = scmp.eq.s32.totalorder %s17, 3
      %p70 = scmp.ne.s32.totalorder %s65, %s67
      %p71 = scmp.eq.s32.totalorder %s17, 0
      %p72 = por %p70, %p71
      %p73 = scmp.ne.s32.totalorder %s65, %s67
      %p74 = scmp.eq.s32.totalorder %s22, 3
      %p75 = por %p73, %p74
      %p76 = scmp.ne.s32.totalorder %s67, %s68
      %p77 = scmp.eq.s32.totalorder %s22, 0
      %p78 = por %p76, %p77
      %p79 = scmp.ne.s32.totalorder %s67, %s68
      %p80 = scmp.eq.s32.totalorder %s23, 3
      %p81 = por %p79, %p80
      %p83 = scmp.ne.s32.totalorder %s68, %s82
      %p84 = scmp.eq.s32.totalorder %s23, 0
      %p85 = por %p83, %p84
      %s87 = sadd.s32 %s86, 1
      %p90 = scmp.eq.s32.totalorder %s17, 3
      %p91 = scmp.ne.s32.totalorder %s86, %s88
      %p92 = scmp.eq.s32.totalorder %s17, 0
      %p93 = por %p91, %p92
      %p94 = scmp.ne.s32.totalorder %s86, %s88
      %p95 = scmp.eq.s32.totalorder %s22, 3
      %p96 = por %p94, %p95
      %p97 = scmp.ne.s32.totalorder %s88, %s89
      %p98 = scmp.eq.s32.totalorder %s22, 0
      %p99 = por %p97, %p98
      %p100 = scmp.ne.s32.totalorder %s88, %s89
      %p101 = scmp.eq.s32.totalorder %s23, 3
      %p102 = por %p100, %p101
      %p104 = scmp.ne.s32.totalorder %s89, %s103
      %p105 = scmp.eq.s32.totalorder %s23, 0
      %p106 = por %p104, %p105
      %s108 = sadd.s32 %s107, 1
      %p111 = scmp.eq.s32.totalorder %s17, 3
      %p112 = scmp.ne.s32.totalorder %s107, %s109
      %p113 = scmp.eq.s32.totalorder %s17, 0
      %p114 = por %p112, %p113
      %p115 = scmp.ne.s32.totalorder %s107, %s109
      %p116 = scmp.eq.s32.totalorder %s22, 3
      %p117 = por %p115, %p116
      %p118 = scmp.ne.s32.totalorder %s109, %s110
      %p119 = scmp.eq.s32.totalorder %s22, 0
      %p120 = por %p118, %p119
      %p121 = scmp.ne.s32.totalorder %s109, %s110
      %p122 = scmp.eq.s32.totalorder %s23, 3
      %p123 = por %p121, %p122
      %p125 = scmp.ne.s32.totalorder %s110, %s124
      %p126 = scmp.eq.s32.totalorder %s23, 0
      %p127 = por %p125, %p126
      %s129 = sadd.s32 %s128, 1
      %p132 = scmp.eq.s32.totalorder %s17, 3
      %p133 = scmp.ne.s32.totalorder %s128, %s130
      %p134 = scmp.eq.s32.totalorder %s17, 0
      %p135 = por %p133, %p134
      %p136 = scmp.ne.s32.totalorder %s128, %s130
      %p137 = scmp.eq.s32.totalorder %s22, 3
      %p138 = por %p136, %p137
      %p139 = scmp.ne.s32.totalorder %s130, %s131
      %p140 = scmp.eq.s32.totalorder %s22, 0
      %p141 = por %p139, %p140
      %p142 = scmp.ne.s32.totalorder %s130, %s131
      %p143 = scmp.eq.s32.totalorder %s23, 3
      %p144 = por %p142, %p143
      %p146 = scmp.ne.s32.totalorder %s131, %s145
      %p147 = scmp.eq.s32.totalorder %s23, 0
      %p148 = por %p146, %p147
      %s150 = sadd.s32 %s149, 1
      %p153 = scmp.eq.s32.totalorder %s17, 3
      %p154 = scmp.ne.s32.totalorder %s149, %s151
      %p155 = scmp.eq.s32.totalorder %s17, 0
      %p156 = por %p154, %p155
      %p157 = scmp.ne.s32.totalorder %s149, %s151
      %p158 = scmp.eq.s32.totalorder %s22, 3
      %p159 = por %p157, %p158
      %p160 = scmp.ne.s32.totalorder %s151, %s152
      %p161 = scmp.eq.s32.totalorder %s22, 0
      %p162 = por %p160, %p161
      %p163 = scmp.ne.s32.totalorder %s151, %s152
      %p164 = scmp.eq.s32.totalorder %s23, 3
      %p165 = por %p163, %p164
      %p167 = scmp.ne.s32.totalorder %s152, %s166
      %p168 = scmp.eq.s32.totalorder %s23, 0
      %p169 = por %p167, %p168
      %s171 = sadd.s32 %s170, 1
      %p174 = scmp.eq.s32.totalorder %s17, 3
      %p175 = scmp.ne.s32.totalorder %s170, %s172
      %p176 = scmp.eq.s32.totalorder %s17, 0
      %p177 = por %p175, %p176
      %p178 = scmp.ne.s32.totalorder %s170, %s172
      %p179 = scmp.eq.s32.totalorder %s22, 3
      %p180 = por %p178, %p179
      %p181 = scmp.ne.s32.totalorder %s172, %s173
      %p182 = scmp.eq.s32.totalorder %s22, 0
      %p183 = por %p181, %p182
      %p184 = scmp.ne.s32.totalorder %s172, %s173
      %p185 = scmp.eq.s32.totalorder %s23, 3
      %p186 = por %p184, %p185
      %p188 = scmp.ne.s32.totalorder %s173, %s187
      %p189 = scmp.eq.s32.totalorder %s23, 0
      %p190 = por %p188, %p189
      %s191 = ssub.s32 %s24, %s36
      %s192 = ssub.s32 %s25, %s32
      %s193 = sor.u32 %s191, %s192
      %p194 = scmp.eq.s32.totalorder %s193, 0
      %s196 = sadd.s32 %s195, 1
      %s197 = scalar_select %p194, %s195, %s196
      %p200 = pneg %p194
      %p201 = scmp.eq.s32.totalorder %s17, 3
      %p202 = por %p200, %p201
      %p203 = scmp.ne.s32.totalorder %s195, %s198
      %p204 = scmp.eq.s32.totalorder %s17, 0
      %p205 = por %p203, %p204
      %p206 = scmp.ne.s32.totalorder %s195, %s198
      %p207 = scmp.eq.s32.totalorder %s22, 3
      %p208 = por %p206, %p207
      %p209 = scmp.ne.s32.totalorder %s198, %s199
      %p210 = scmp.eq.s32.totalorder %s22, 0
      %p211 = por %p209, %p210
      %p212 = scmp.ne.s32.totalorder %s198, %s199
      %p213 = scmp.eq.s32.totalorder %s23, 3
      %p214 = por %p212, %p213
      %p216 = scmp.ne.s32.totalorder %s199, %s215
      %p217 = scmp.eq.s32.totalorder %s23, 0
      %p218 = por %p216, %p217
      %s219 = ssub.s32 %s24, %s36
      %s220 = ssub.s32 %s25, %s32
      %s221 = sor.u32 %s219, %s220
      %p222 = scmp.eq.s32.totalorder %s221, 0
      %s224 = sadd.s32 %s223, 1
      %s225 = scalar_select %p222, %s223, %s224
      %p228 = pneg %p222
      %p229 = scmp.eq.s32.totalorder %s17, 3
      %p230 = por %p228, %p229
      %p231 = scmp.ne.s32.totalorder %s223, %s226
      %p232 = scmp.eq.s32.totalorder %s17, 0
      %p233 = por %p231, %p232
      %p234 = scmp.ne.s32.totalorder %s223, %s226
      %p235 = scmp.eq.s32.totalorder %s22, 3
      %p236 = por %p234, %p235
      %p237 = scmp.ne.s32.totalorder %s226, %s227
      %p238 = scmp.eq.s32.totalorder %s22, 0
      %p239 = por %p237, %p238
      %p240 = scmp.ne.s32.totalorder %s226, %s227
      %p241 = scmp.eq.s32.totalorder %s23, 3
      %p242 = por %p240, %p241
      %p244 = scmp.ne.s32.totalorder %s227, %s243
      %p245 = scmp.eq.s32.totalorder %s23, 0
      %p246 = por %p244, %p245
      %s247 = ssub.s32 %s24, %s36
      %p248 = scmp.eq.s32.totalorder %s247, 0
      %s250 = sadd.s32 %s249, 1
      %s251 = scalar_select %p248, %s249, %s250
      %p254 = pneg %p248
      %p255 = scmp.eq.s32.totalorder %s17, 3
      %p256 = por %p254, %p255
      %p257 = scmp.ne.s32.totalorder %s249, %s252
      %p258 = scmp.eq.s32.totalorder %s17, 0
      %p259 = por %p257, %p258
      %p260 = scmp.ne.s32.totalorder %s249, %s252
      %p261 = scmp.eq.s32.totalorder %s22, 3
      %p262 = por %p260, %p261
      %p263 = scmp.ne.s32.totalorder %s252, %s253
      %p264 = scmp.eq.s32.totalorder %s22, 0
      %p265 = por %p263, %p264
      %p266 = scmp.ne.s32.totalorder %s252, %s253
      %p267 = scmp.eq.s32.totalorder %s23, 3
      %p268 = por %p266, %p267
      %p270 = scmp.ne.s32.totalorder %s253, %s269
      %p271 = scmp.eq.s32.totalorder %s23, 0
      %p272 = por %p270, %p271
      %s273 = ssub.s32 %s24, %s36
      %p274 = scmp.eq.s32.totalorder %s273, 0
      %s276 = sadd.s32 %s275, 1
      %s277 = scalar_select %p274, %s275, %s276
      %p280 = pneg %p274
      %p281 = scmp.eq.s32.totalorder %s17, 3
      %p282 = por %p280, %p281
      %p283 = scmp.ne.s32.totalorder %s275, %s278
      %p284 = scmp.eq.s32.totalorder %s17, 0
      %p285 = por %p283, %p284
      %p286 = scmp.ne.s32.totalorder %s275, %s278
      %p287 = scmp.eq.s32.totalorder %s22, 3
      %p288 = por %p286, %p287
      %p289 = scmp.ne.s32.totalorder %s278, %s279
      %p290 = scmp.eq.s32.totalorder %s22, 0
      %p291 = por %p289, %p290
      %p292 = scmp.ne.s32.totalorder %s278, %s279
      %p293 = scmp.eq.s32.totalorder %s23, 3
      %p294 = por %p292, %p293
      %p296 = scmp.ne.s32.totalorder %s279, %s295
      %p297 = scmp.eq.s32.totalorder %s23, 0
      %p298 = por %p296, %p297
      %p299 = scmp.le.s32.totalorder 1, %s17
      %p300 = scmp.lt.s32.totalorder %s17, 5
      %p301 = pnand %p299, %p300
      %p302 = pneg %p301
      // Predicated region
      $region9: #{lfq_forward.1} parent=5 // pred_check
        _
      $region10: #{lfq_forward.1} parent=5 // pred_check_branch
        %304 = sbr.rel (%p301) target = $region12
      $region11: #{lfq_forward.1} parent=5 // pred_region
        %s305 = ssub.s32 %s17, 1
        // Predicated region
        $region13: #{lfq_forward.1} parent=11 // pred_check
          %p306 = pneg %p78
        $region14: #{lfq_forward.1} parent=11 // pred_check_branch
          %308 = sbr.rel (%p306) target = $region16
        $region15: #{lfq_forward.1} parent=11 // pred_region
          _
        $region16: #{lfq_forward.1} parent=11 // pred_fallthru
          _
        // Predicated region
        $region17: #{lfq_forward.1} parent=11 // pred_check
          %p309 = pneg %p99
        $region18: #{lfq_forward.1} parent=11 // pred_check_branch
          %311 = sbr.rel (%p309) target = $region20
        $region19: #{lfq_forward.1} parent=11 // pred_region
          _
        $region20: #{lfq_forward.1} parent=11 // pred_fallthru
          _
        // Predicated region
        $region21: #{lfq_forward.1} parent=11 // pred_check
          %p312 = pneg %p120
        $region22: #{lfq_forward.1} parent=11 // pred_check_branch
          %314 = sbr.rel (%p312) target = $region24
        $region23: #{lfq_forward.1} parent=11 // pred_region
          _
        $region24: #{lfq_forward.1} parent=11 // pred_fallthru
          _
        // Predicated region
        $region25: #{lfq_forward.1} parent=11 // pred_check
          %p315 = pneg %p141
        $region26: #{lfq_forward.1} parent=11 // pred_check_branch
          %317 = sbr.rel (%p315) target = $region28
        $region27: #{lfq_forward.1} parent=11 // pred_region
          _
        $region28: #{lfq_forward.1} parent=11 // pred_fallthru
          _
        // Predicated region
        $region29: #{lfq_forward.1} parent=11 // pred_check
          %p318 = pneg %p162
        $region30: #{lfq_forward.1} parent=11 // pred_check_branch
          %320 = sbr.rel (%p318) target = $region32
        $region31: #{lfq_forward.1} parent=11 // pred_region
          _
        $region32: #{lfq_forward.1} parent=11 // pred_fallthru
          _
        // Predicated region
        $region33: #{lfq_forward.1} parent=11 // pred_check
          %p321 = pneg %p183
        $region34: #{lfq_forward.1} parent=11 // pred_check_branch
          %323 = sbr.rel (%p321) target = $region36
        $region35: #{lfq_forward.1} parent=11 // pred_region
          _
        $region36: #{lfq_forward.1} parent=11 // pred_fallthru
          _
      $region12: #{lfq_forward.1} parent=5 // pred_fallthru
        _
      %p324 = scmp.lt.s32.totalorder %s17, 4
      // Predicated region
      $region37: #{lfq_forward.1} parent=5 // pred_check
        %p325 = pneg %p324
      $region38: #{lfq_forward.1} parent=5 // pred_check_branch
        %327 = sbr.rel (%p325) target = $region40
      $region39: #{lfq_forward.1} parent=5 // pred_region
        // Predicated region
        $region41: #{lfq_forward.1} parent=39 // pred_check
          %p328 = pneg %p51
        $region42: #{lfq_forward.1} parent=39 // pred_check_branch
          %330 = sbr.rel (%p328) target = $region44
        $region43: #{lfq_forward.1} parent=39 // pred_region
          %s331 = sand.u32 %s41, 1
          %s332 = sand.u32 %s41, 1
          %s333 = smul.addr %s332, 32
          %s334 = scalar_lea.vmem [#allocation2], %s333
          %s335 = smul.addr %s24, 8
          %s336 = sadd.s32 %s25, %s335
          %s337 = smul.addr %s336, 8
          %s338 = scalar_lea.vmem %s0, %s337
          // Predicated region
          $region45: #{lfq_forward.1} parent=43 // pred_check
            _
          $region46: #{lfq_forward.1} parent=43 // pred_check_branch
            %340 = sbr.rel (0) target = $region48
          $region47: #{lfq_forward.1} parent=43 // pred_region
            // Predicated region
            $region49: #{lfq_forward.1} parent=47 // pred_check
              _
            $region50: #{lfq_forward.1} parent=47 // pred_check_branch
              %342 = sbr.rel (0) target = $region52
            $region51: #{lfq_forward.1} parent=47 // pred_region
              // Predicated region
              $region64: #{lfq_forward.1} parent=51 // pred_check
                _
              $region65: #{lfq_forward.1} parent=51 // pred_check_branch
                %364 = sbr.rel (0) target = $region67
              $region66: #{lfq_forward.1} parent=51 // pred_region
                loop: start=0, step=1, limit=1
                $region68: #{lfq_forward.1} parent=66 // loop_pre_header
                  _
                $region69: #{lfq_forward.1} parent=66 // loop_header
                  %s366 = sphi 0, %s370
                  %p367 = scmp.ge.s32.totalorder %s366, 1
                  %s371 = sphi %s338, %s338
                  %s372 = sphi %s334, %s334
                $region70: #{lfq_forward.1} parent=66 // loop_header_branch
                  %369 = sbr.rel (%p367) target = $region74
                $region71: #{lfq_forward.1} parent=66 // loop_body
                  %v373 = vld [vmem:[%s371] sm:$0xff]
                  %374 = vst [vmem:[%s372] sm:$0xff] %v373
                  %v375 = vld [vmem:[%s371 + $0x10] sm:$0xff]
                  %376 = vst [vmem:[%s372 + $0x8] sm:$0xff] %v375
                  %v377 = vld [vmem:[%s371 + $0x20] sm:$0xff]
                  %378 = vst [vmem:[%s372 + $0x10] sm:$0xff] %v377
                  %v379 = vld [vmem:[%s371 + $0x30] sm:$0xff]
                  %380 = vst [vmem:[%s372 + $0x18] sm:$0xff] %v379
                $region72: #{lfq_forward.1} parent=66 // loop_footer
                  %s370 = sadd.s32 1, %s366
                $region73: #{lfq_forward.1} parent=66 // loop_footer_branch
                  %365 = sbr.rel target = $region69
                $region74: #{lfq_forward.1} parent=66 // loop_exit
                  _
              $region67: #{lfq_forward.1} parent=51 // pred_fallthru
                _
              // Predicated region
              $region75: #{lfq_forward.1} parent=51 // pred_check
                _
              $region76: #{lfq_forward.1} parent=51 // pred_check_branch
                %382 = sbr.rel target = $region78
              $region77: #{lfq_forward.1} parent=51 // pred_region
                _
              $region78: #{lfq_forward.1} parent=51 // pred_fallthru
                _
            $region52: #{lfq_forward.1} parent=47 // pred_fallthru
              _
            // Predicated region
            $region53: #{lfq_forward.1} parent=47 // pred_check
              _
            $region54: #{lfq_forward.1} parent=47 // pred_check_branch
              %344 = sbr.rel target = $region56
            $region55: #{lfq_forward.1} parent=47 // pred_region
              %s346 = ssub.s32 256, 1
              loop: start=0, step=1, limit=1
              $region57: #{lfq_forward.1} parent=55 // loop_pre_header
                _
              $region58: #{lfq_forward.1} parent=55 // loop_header
                %s348 = sphi 0, %s352
                %p349 = scmp.ge.s32.totalorder %s348, 1
                %s353 = sphi %s338, %s338
                %s354 = sphi %s334, %s334
              $region59: #{lfq_forward.1} parent=55 // loop_header_branch
                %351 = sbr.rel (%p349) target = $region63
              $region60: #{lfq_forward.1} parent=55 // loop_body
                %v355 = vld [vmem:[%s353] sm:%s346]
                %356 = vst [vmem:[%s354] sm:%s346] %v355
                %v357 = vld [vmem:[%s353 + $0x10] sm:%s346]
                %358 = vst [vmem:[%s354 + $0x8] sm:%s346] %v357
                %v359 = vld [vmem:[%s353 + $0x20] sm:%s346]
                %360 = vst [vmem:[%s354 + $0x10] sm:%s346] %v359
                %v361 = vld [vmem:[%s353 + $0x30] sm:%s346]
                %362 = vst [vmem:[%s354 + $0x18] sm:%s346] %v361
              $region61: #{lfq_forward.1} parent=55 // loop_footer
                %s352 = sadd.s32 1, %s348
              $region62: #{lfq_forward.1} parent=55 // loop_footer_branch
                %347 = sbr.rel target = $region58
              $region63: #{lfq_forward.1} parent=55 // loop_exit
                _
            $region56: #{lfq_forward.1} parent=47 // pred_fallthru
              _
          $region48: #{lfq_forward.1} parent=43 // pred_fallthru
            _
          %383 = vnop
        $region44: #{lfq_forward.1} parent=39 // pred_fallthru
          _
      $region40: #{lfq_forward.1} parent=5 // pred_fallthru
        _
      %p384 = scmp.le.s32.totalorder 1, %s17
      %p385 = scmp.lt.s32.totalorder %s17, 5
      %p386 = pnand %p384, %p385
      %p387 = pneg %p386
      // Predicated region
      $region79: #{lfq_forward.1} parent=5 // pred_check
        _
      $region80: #{lfq_forward.1} parent=5 // pred_check_branch
        %389 = sbr.rel (%p386) target = $region82
      $region81: #{lfq_forward.1} parent=5 // pred_region
        %s390 = ssub.s32 %s17, 1
        %s391 = sand.u32 %s44, 1
        %s392 = sand.u32 %s44, 1
        %s393 = smul.addr %s392, 32
        %s394 = scalar_lea.vmem [#allocation2], %s393
        // Predicated region
        $region83: #{lfq_forward.1} parent=81 // pred_check
          %p395 = pneg %p57
        $region84: #{lfq_forward.1} parent=81 // pred_check_branch
          %397 = sbr.rel (%p395) target = $region86
        $region85: #{lfq_forward.1} parent=81 // pred_region
          _
        $region86: #{lfq_forward.1} parent=81 // pred_fallthru
          _
        %s398 = sand.u32 %s44, 1
        %s399 = sand.u32 %s44, 1
        %s400 = smul.addr %s399, 32
        %s401 = scalar_lea.vmem [#allocation2], %s400
        %p402 = pneg %p57
        %p403 = pneg %p54
        %p404 = pneg %p78
        %p405 = pneg %p75
        %p406 = pneg %p99
        %p407 = pneg %p96
        %p408 = pneg %p120
        %p409 = pneg %p117
        %p410 = pneg %p141
        %p411 = pneg %p138
        %p412 = pneg %p162
        %p413 = pneg %p159
        %p414 = pneg %p183
        %p415 = pneg %p180
        %p416 = pneg %p211
        %p417 = pneg %p208
        %s418 = sand.u32 %s198, 1
        %s419 = sand.u32 %s198, 1
        %s420 = smul.addr %s419, 32
        %s421 = scalar_lea.vmem [#allocation3], %s420
        %p422 = pneg %p239
        %p423 = pneg %p236
        %p424 = scmp.lt.s32.totalorder %s26, 1
        %s425 = scalar_select %p424, %s26, 1
        %p426 = scmp.lt.s32.totalorder %s27, 1
        %s427 = scalar_select %p426, %s27, 1
        %s428 = smul.addr %s425, 2
        %s429 = sadd.s32 %s427, %s428
        %s430 = scalar_lea.vmem %s8, %s429
        %p431 = pneg %p265
        %p432 = pneg %p262
        %p433 = scmp.lt.s32.totalorder %s26, 1
        %s434 = scalar_select %p433, %s26, 1
        %s435 = smul.addr %s434, 32
        %s436 = smul.addr %s435, 8
        %s437 = scalar_lea.vmem %s9, %s436
        %p438 = pneg %p291
        %p439 = pneg %p288
        %p440 = scmp.lt.s32.totalorder %s26, 1
        %s441 = scalar_select %p440, %s26, 1
        %s442 = scalar_lea.vmem %s10, %s441
        %p443 = scmp.lt.s32.totalorder %s26, 1
        %s444 = scalar_select %p443, %s26, 1
        %p445 = scmp.lt.s32.totalorder %s27, 1
        %s446 = scalar_select %p445, %s27, 1
        %s447 = smul.addr %s444, 2
        %s448 = sadd.s32 %s446, %s447
        %s449 = scalar_lea.vmem %s8, %s448
        %p450 = scmp.lt.s32.totalorder %s26, 1
        %s451 = scalar_select %p450, %s26, 1
        %s452 = smul.addr %s451, 32
        %s453 = smul.addr %s452, 8
        %s454 = scalar_lea.vmem %s9, %s453
        %p455 = scmp.lt.s32.totalorder %s26, 1
        %s456 = scalar_select %p455, %s26, 1
        %s457 = scalar_lea.vmem %s10, %s456
        %p458 = scmp.eq.s32.totalorder %s27, 0
        // Predicated region
        $region87: #{lfq_forward.1} parent=81 // pred_check
          %p459 = pneg %p458
        $region88: #{lfq_forward.1} parent=81 // pred_check_branch
          %461 = sbr.rel (%p459) target = $region90
        $region89: #{lfq_forward.1} parent=81 // pred_region
          %vm462 = vcmask 7168
          %463 = vst.msk [vmem:[%s454] sm:$0xff] %vm462, 0.0
          %464 = vst.msk [vmem:[%s454 + $0x8] sm:$0xff] %vm462, 0.0
          %465 = vst.msk [vmem:[%s454 + $0x10] sm:$0xff] %vm462, 0.0
          %466 = vst.msk [vmem:[%s454 + $0x18] sm:$0xff] %vm462, 0.0
          %467 = vst.msk [vmem:[%s454 + $0x20] sm:$0xff] %vm462, 0.0
          %468 = vst.msk [vmem:[%s454 + $0x28] sm:$0xff] %vm462, 0.0
          %469 = vst.msk [vmem:[%s454 + $0x30] sm:$0xff] %vm462, 0.0
          %470 = vst.msk [vmem:[%s454 + $0x38] sm:$0xff] %vm462, 0.0
          %471 = vst.msk [vmem:[%s454 + $0x40] sm:$0xff] %vm462, 0.0
          %472 = vst.msk [vmem:[%s454 + $0x48] sm:$0xff] %vm462, 0.0
          %473 = vst.msk [vmem:[%s454 + $0x50] sm:$0xff] %vm462, 0.0
          %474 = vst.msk [vmem:[%s454 + $0x58] sm:$0xff] %vm462, 0.0
          %475 = vst.msk [vmem:[%s454 + $0x60] sm:$0xff] %vm462, 0.0
          %476 = vst.msk [vmem:[%s454 + $0x68] sm:$0xff] %vm462, 0.0
          %477 = vst.msk [vmem:[%s454 + $0x70] sm:$0xff] %vm462, 0.0
          %478 = vst.msk [vmem:[%s454 + $0x78] sm:$0xff] %vm462, 0.0
          %479 = vst.msk [vmem:[%s454 + $0x80] sm:$0xff] %vm462, 0.0
          %480 = vst.msk [vmem:[%s454 + $0x88] sm:$0xff] %vm462, 0.0
          %481 = vst.msk [vmem:[%s454 + $0x90] sm:$0xff] %vm462, 0.0
          %482 = vst.msk [vmem:[%s454 + $0x98] sm:$0xff] %vm462, 0.0
          %483 = vst.msk [vmem:[%s454 + $0xa0] sm:$0xff] %vm462, 0.0
          %484 = vst.msk [vmem:[%s454 + $0xa8] sm:$0xff] %vm462, 0.0
          %485 = vst.msk [vmem:[%s454 + $0xb0] sm:$0xff] %vm462, 0.0
          %486 = vst.msk [vmem:[%s454 + $0xb8] sm:$0xff] %vm462, 0.0
          %487 = vst.msk [vmem:[%s454 + $0xc0] sm:$0xff] %vm462, 0.0
          %488 = vst.msk [vmem:[%s454 + $0xc8] sm:$0xff] %vm462, 0.0
          %489 = vst.msk [vmem:[%s454 + $0xd0] sm:$0xff] %vm462, 0.0
          %490 = vst.msk [vmem:[%s454 + $0xd8] sm:$0xff] %vm462, 0.0
          %491 = vst.msk [vmem:[%s454 + $0xe0] sm:$0xff] %vm462, 0.0
          %492 = vst.msk [vmem:[%s454 + $0xe8] sm:$0xff] %vm462, 0.0
          %493 = vst.msk [vmem:[%s454 + $0xf0] sm:$0xff] %vm462, 0.0
          %494 = vst.msk [vmem:[%s454 + $0xf8] sm:$0xff] %vm462, 0.0
          %vm495 = vcmask 0
          %496 = vst.msk [vmem:[%s457] sm:$0x1] %vm495, 0.0
        $region90: #{lfq_forward.1} parent=81 // pred_fallthru
          _
        %v497 = vld [vmem:[%s394] sm:$0xff]
        %v498 = vld [vmem:[%s394 + $0x8] sm:$0xff]
        %v499 = vld [vmem:[%s394 + $0x10] sm:$0xff]
        %v500 = vld [vmem:[%s394 + $0x18] sm:$0xff]
        %v501 = vld [vmem:[%s1] sm:$0xff]
        %v502 = vld [vmem:[%s2] sm:$0xff]
        %504 = vset.pattern.permute.xlu0 0
        %505 = vperm.xlu0 %504, %v502
        %v506 = vpop.permute.xlu0 %505
        %vm508 = vcmask 261120
        %v510 = vsel %vm508, %v501, 0
        %512 = vmatprep.subr.mxu0 0.0
        %513 = vmatpush1.msra.mxu0 0.0
        %514 = vmatprep.subr.mxu0 0.0
        %515 = vmatpush1.msra.mxu0 0.0
        %516 = vmatprep.subr.mxu0 0.0
        %517 = vmatpush1.msra.mxu0 0.0
        %518 = vmatprep.subr.mxu0 0.0
        %519 = vmatpush1.msra.mxu0 0.0
        %520 = vmatprep.subr.mxu0 0.0
        %521 = vmatpush1.msra.mxu0 0.0
        %522 = vmatprep.subr.mxu0 0.0
        %523 = vmatpush1.msra.mxu0 0.0
        %524 = vmatprep.subr.mxu0 0.0
        %525 = vmatpush1.msra.mxu0 0.0
        %526 = vmatprep.subr.mxu0 0.0
        %527 = vmatpush1.msra.mxu0 0.0
        %528 = vmatprep.subr.mxu0 0.0
        %529 = vmatpush1.msra.mxu0 0.0
        %530 = vmatprep.subr.mxu0 0.0
        %531 = vmatpush1.msra.mxu0 0.0
        %532 = vmatprep.subr.mxu0 0.0
        %533 = vmatpush1.msra.mxu0 0.0
        %534 = vmatprep.subr.mxu0 0.0
        %535 = vmatpush1.msra.mxu0 0.0
        %536 = vmatprep.subr.mxu0 0.0
        %537 = vmatpush1.msra.mxu0 %v500
        %538 = vmatprep.subr.mxu0 0.0
        %539 = vmatpush1.msra.mxu0 %v499
        %540 = vmatprep.subr.mxu0 0.0
        %541 = vmatpush1.msra.mxu0 %v498
        %542 = vmatprep.subr.mxu0 0.0
        %543 = vmatpush1.msra.mxu0 %v497
        %544 = vmatprep.subr.mxu0 0.0
        %545 = vmatpush2.msra.mxu0 0.0
        %546 = vmatprep.subr.mxu0 0.0
        %547 = vmatpush2.msra.mxu0 0.0
        %548 = vmatprep.subr.mxu0 0.0
        %549 = vmatpush2.msra.mxu0 0.0
        %550 = vmatprep.subr.mxu0 0.0
        %551 = vmatpush2.msra.mxu0 0.0
        %552 = vmatprep.subr.mxu0 0.0
        %553 = vmatpush2.msra.mxu0 0.0
        %554 = vmatprep.subr.mxu0 0.0
        %555 = vmatpush2.msra.mxu0 0.0
        %556 = vmatprep.subr.mxu0 0.0
        %557 = vmatpush2.msra.mxu0 0.0
        %558 = vmatprep.subr.mxu0 0.0
        %559 = vmatpush2.msra.mxu0 0.0
        %560 = vmatprep.subr.mxu0 0.0
        %561 = vmatpush2.msra.mxu0 0.0
        %562 = vmatprep.subr.mxu0 0.0
        %563 = vmatpush2.msra.mxu0 0.0
        %564 = vmatprep.subr.mxu0 0.0
        %565 = vmatpush2.msra.mxu0 0.0
        %566 = vmatprep.subr.mxu0 0.0
        %567 = vmatpush2.msra.mxu0 0.0
        %568 = vmatprep.subr.mxu0 0.0
        %569 = vmatpush2.msra.mxu0 0.0
        %570 = vmatprep.subr.mxu0 0.0
        %571 = vmatpush2.msra.mxu0 0.0
        %572 = vmatprep.subr.mxu0 0.0
        %573 = vmatpush2.msra.mxu0 0.0
        %574 = vmatprep.subr.mxu0 0.0
        %575 = vmatpush2.msra.mxu0 0.0
        %576 = vmatprep.mubr.f32.mxu0 0.0
        %577 = vmatmul.mubr.f32.gmra.mxu0 %v510
        %v578 = vpop.f32.mrf.mxu0
        %v579 = vadd.f32 %v506, %v578
        %v580 = vpop.f32.mrf.mxu0
        %581 = vdwg.mxu0
        %vm582 = vcmp.gt.f32.partialorder %v579, 0.0
        %v583 = vsel %vm582, 1.0, -1.0
        %v584 = vld [vmem:[%s3] sm:$0xff]
        %v585 = vld [vmem:[%s3 + $0x8] sm:$0xff]
        %v586 = vld [vmem:[%s3 + $0x10] sm:$0xff]
        %v587 = vld [vmem:[%s3 + $0x18] sm:$0xff]
        %v588 = vld [vmem:[%s4] sm:$0xff]
        %v589 = vld [vmem:[%s4 + $0x8] sm:$0xff]
        %v590 = vld [vmem:[%s4 + $0x10] sm:$0xff]
        %v591 = vld [vmem:[%s4 + $0x18] sm:$0xff]
        %593 = vset.pattern.permute.xlu0 0
        %594 = vperm.xlu0 %593, %v588
        %v595 = vpop.permute.xlu0 %594
        %598 = vset.pattern.permute.xlu0 0
        %599 = vperm.xlu0 %598, %v589
        %v600 = vpop.permute.xlu0 %599
        %603 = vset.pattern.permute.xlu0 0
        %604 = vperm.xlu0 %603, %v590
        %v605 = vpop.permute.xlu0 %604
        %608 = vset.pattern.permute.xlu0 0
        %609 = vperm.xlu0 %608, %v591
        %v610 = vpop.permute.xlu0 %609
        %vm612 = vcmask 64512
        %v614 = vsel %vm612, %v584, 0
        %v617 = vsel %vm612, %v585, 0
        %v620 = vsel %vm612, %v586, 0
        %v623 = vsel %vm612, %v587, 0
        %625 = vmatprep.subr.mxu0 0.0
        %626 = vmatpush1.msra.mxu0 0.0
        %627 = vmatprep.subr.mxu0 0.0
        %628 = vmatpush1.msra.mxu0 0.0
        %629 = vmatprep.subr.mxu0 0.0
        %630 = vmatpush1.msra.mxu0 0.0
        %631 = vmatprep.subr.mxu0 0.0
        %632 = vmatpush1.msra.mxu0 0.0
        %633 = vmatprep.subr.mxu0 0.0
        %634 = vmatpush1.msra.mxu0 0.0
        %635 = vmatprep.subr.mxu0 0.0
        %636 = vmatpush1.msra.mxu0 0.0
        %637 = vmatprep.subr.mxu0 0.0
        %638 = vmatpush1.msra.mxu0 0.0
        %639 = vmatprep.subr.mxu0 0.0
        %640 = vmatpush1.msra.mxu0 0.0
        %641 = vmatprep.subr.mxu0 0.0
        %642 = vmatpush1.msra.mxu0 0.0
        %643 = vmatprep.subr.mxu0 0.0
        %644 = vmatpush1.msra.mxu0 0.0
        %645 = vmatprep.subr.mxu0 0.0
        %646 = vmatpush1.msra.mxu0 0.0
        %647 = vmatprep.subr.mxu0 0.0
        %648 = vmatpush1.msra.mxu0 0.0
        %649 = vmatprep.subr.mxu0 0.0
        %650 = vmatpush1.msra.mxu0 0.0
        %651 = vmatprep.subr.mxu0 0.0
        %652 = vmatpush1.msra.mxu0 0.0
        %653 = vmatprep.subr.mxu0 0.0
        %654 = vmatpush1.msra.mxu0 0.0
        %655 = vmatprep.subr.mxu0 0.0
        %656 = vmatpush1.msra.mxu0 %v583
        %657 = vmatprep.subr.mxu0 0.0
        %658 = vmatpush2.msra.mxu0 0.0
        %659 = vmatprep.subr.mxu0 0.0
        %660 = vmatpush2.msra.mxu0 0.0
        %661 = vmatprep.subr.mxu0 0.0
        %662 = vmatpush2.msra.mxu0 0.0
        %663 = vmatprep.subr.mxu0 0.0
        %664 = vmatpush2.msra.mxu0 0.0
        %665 = vmatprep.subr.mxu0 0.0
        %666 = vmatpush2.msra.mxu0 0.0
        %667 = vmatprep.subr.mxu0 0.0
        %668 = vmatpush2.msra.mxu0 0.0
        %669 = vmatprep.subr.mxu0 0.0
        %670 = vmatpush2.msra.mxu0 0.0
        %671 = vmatprep.subr.mxu0 0.0
        %672 = vmatpush2.msra.mxu0 0.0
        %673 = vmatprep.subr.mxu0 0.0
        %674 = vmatpush2.msra.mxu0 0.0
        %675 = vmatprep.subr.mxu0 0.0
        %676 = vmatpush2.msra.mxu0 0.0
        %677 = vmatprep.subr.mxu0 0.0
        %678 = vmatpush2.msra.mxu0 0.0
        %679 = vmatprep.subr.mxu0 0.0
        %680 = vmatpush2.msra.mxu0 0.0
        %681 = vmatprep.subr.mxu0 0.0
        %682 = vmatpush2.msra.mxu0 0.0
        %683 = vmatprep.subr.mxu0 0.0
        %684 = vmatpush2.msra.mxu0 0.0
        %685 = vmatprep.subr.mxu0 0.0
        %686 = vmatpush2.msra.mxu0 0.0
        %687 = vmatprep.subr.mxu0 0.0
        %688 = vmatpush2.msra.mxu0 0.0
        %689 = vmatprep.mubr.f32.mxu0 0.0
        %690 = vmatmul.mubr.f32.gmra.mxu0 %v614
        %v691 = vpop.f32.mrf.mxu0
        %v692 = vadd.f32 %v595, %v691
        %v693 = vpop.f32.mrf.mxu0
        %694 = vmatprep.mubr.f32.mxu0 0.0
        %695 = vmatmul.mubr.f32.gmra.mxu0 %v617
        %v696 = vpop.f32.mrf.mxu0
        %v697 = vadd.f32 %v600, %v696
        %v698 = vpop.f32.mrf.mxu0
        %699 = vmatprep.mubr.f32.mxu0 0.0
        %700 = vmatmul.mubr.f32.gmra.mxu0 %v620
        %v701 = vpop.f32.mrf.mxu0
        %v702 = vadd.f32 %v605, %v701
        %v703 = vpop.f32.mrf.mxu0
        %704 = vmatprep.mubr.f32.mxu0 0.0
        %705 = vmatmul.mubr.f32.gmra.mxu0 %v623
        %v706 = vpop.f32.mrf.mxu0
        %v707 = vadd.f32 %v610, %v706
        %v708 = vpop.f32.mrf.mxu0
        %709 = vdwg.mxu0
        %710 = vst [vmem:[%s421] sm:$0xff] %v692
        %711 = vst [vmem:[%s421 + $0x8] sm:$0xff] %v697
        %712 = vst [vmem:[%s421 + $0x10] sm:$0xff] %v702
        %713 = vst [vmem:[%s421 + $0x18] sm:$0xff] %v707
        %v714 = vsel %vm582, 1, 0
        %v715 = vcvt.s32.f32 %v714
        %v716 = vld [vmem:[%s6] sm:$0xff]
        %718 = vset.pattern.permute.xlu0 0
        %719 = vperm.xlu0 %718, %v716
        %v720 = vpop.permute.xlu0 %719
        %v722 = vmul.f32 %v715, %v720
        %v723 = vrot.slane %v722, 4
        %v724 = vadd.f32 %v722, %v723
        %v725 = vrot.slane %v724, 2
        %v726 = vadd.f32 %v724, %v725
        %v727 = vrot.slane %v726, 1
        %v728 = vadd.f32 %v726, %v727
        %v729 = vcvt.f32.s32.to.zero.pseudo %v728
        %730 = vst [vmem:[%s449] sm:$0x1] %v729
        %v731 = vmul.f32 %v579, 200.0
        %v732 = vand.u32 2147483647, %v731
        %v733 = vmul.f32 %v732, -2.0
        %v734 = vmul.f32 %v733, 1.442695
        %v735 = vpow.pop %v734
        %v736 = vadd.f32 %v735, 1.0
        %v737 = vrcp.pop %v736
        %v738 = vmul.f32 %v736, %v737
        %v739 = vsub.f32 2.0, %v738
        %v740 = vmul.f32 %v737, %v739
        %v741 = vmul.f32 %v735, %v740
        %vm742 = vcmp.ge.f32.partialorder %v731, 0.0
        %v743 = vsel %vm742, %v740, %v741
        %v744 = vsel %vm742, %v741, %v740
        %v745 = vlog2.pop %v736
        %v746 = vmul.f32 %v745, 0.6931472
        %v747 = vadd.f32 %v732, %v746
        %v748 = vrot.slane %v747, 4
        %v749 = vadd.f32 %v747, %v748
        %v750 = vrot.slane %v749, 2
        %v751 = vadd.f32 %v749, %v750
        %v752 = vrot.slane %v751, 1
        %v753 = vadd.f32 %v751, %v752
        %v755 = vrot.slane %v744, 7
        %v758 = vrot.slane %v743, 6
        %vm760 = vcmask 1040384
        %v761 = vsel %vm760, %v755, %v758
        %v762 = vlaneseq
        %v763 = vshrl.u32 %v762, 7
        %v764 = vsub.s32 6, %v763
        %v765 = vrot.slane %v744, %v764
        %v766 = vmul.f32 %v761, %v765
        %v767 = vlaneseq
        %v768 = vshrl.u32 %v767, 7
        %v769 = vsub.s32 6, %v768
        %v770 = vrot.slane %v743, %v769
        %v771 = vmul.f32 %v761, %v770
        %v773 = vrot.slane %v771, 6
        %vm775 = vcmask 1041408
        %v776 = vsel %vm775, %v766, %v773
        %v777 = vlaneseq
        %v778 = vshrl.u32 %v777, 7
        %v779 = vsub.s32 5, %v778
        %v780 = vrot.slane %v744, %v779
        %v781 = vmul.f32 %v776, %v780
        %v782 = vlaneseq
        %v783 = vshrl.u32 %v782, 7
        %v784 = vsub.s32 5, %v783
        %v785 = vrot.slane %v743, %v784
        %v786 = vmul.f32 %v776, %v785
        %v788 = vrot.slane %v786, 4
        %vm790 = vcmask 1043456
        %v791 = vsel %vm790, %v781, %v788
        %v792 = vlaneseq
        %v793 = vshrl.u32 %v792, 7
        %v794 = vsub.s32 4, %v793
        %v795 = vrot.slane %v744, %v794
        %v796 = vmul.f32 %v791, %v795
        %v797 = vlaneseq
        %v798 = vshrl.u32 %v797, 7
        %v799 = vsub.s32 4, %v798
        %v800 = vrot.slane %v743, %v799
        %v801 = vmul.f32 %v791, %v800
        %v802 = vlaneseq
        %v803 = vshrl.u32 %v802, 7
        %v804 = vsub.s32 3, %v803
        %v805 = vrot.slane %v744, %v804
        %v806 = vmul.f32 %v796, %v805
        %v807 = vmul.f32 %v801, %v805
        %v808 = vlaneseq
        %v809 = vshrl.u32 %v808, 7
        %v810 = vsub.s32 3, %v809
        %v811 = vrot.slane %v743, %v810
        %v812 = vmul.f32 %v796, %v811
        %v813 = vmul.f32 %v801, %v811
        %v814 = vlaneseq
        %v815 = vshrl.u32 %v814, 7
        %v816 = vsub.s32 2, %v815
        %v817 = vrot.slane %v744, %v816
        %v818 = vmul.f32 %v806, %v817
        %v819 = vmul.f32 %v807, %v817
        %v820 = vmul.f32 %v812, %v817
        %v821 = vmul.f32 %v813, %v817
        %v822 = vlaneseq
        %v823 = vshrl.u32 %v822, 7
        %v824 = vsub.s32 2, %v823
        %v825 = vrot.slane %v743, %v824
        %v826 = vmul.f32 %v806, %v825
        %v827 = vmul.f32 %v807, %v825
        %v828 = vmul.f32 %v812, %v825
        %v829 = vmul.f32 %v813, %v825
        %v830 = vlaneseq
        %v831 = vshrl.u32 %v830, 7
        %v832 = vsub.s32 1, %v831
        %v833 = vrot.slane %v744, %v832
        %v834 = vmul.f32 %v818, %v833
        %v835 = vmul.f32 %v819, %v833
        %v836 = vmul.f32 %v820, %v833
        %v837 = vmul.f32 %v821, %v833
        %v838 = vmul.f32 %v826, %v833
        %v839 = vmul.f32 %v827, %v833
        %v840 = vmul.f32 %v828, %v833
        %v841 = vmul.f32 %v829, %v833
        %v842 = vlaneseq
        %v843 = vshrl.u32 %v842, 7
        %v844 = vsub.s32 1, %v843
        %v845 = vrot.slane %v743, %v844
        %v846 = vmul.f32 %v818, %v845
        %v847 = vmul.f32 %v819, %v845
        %v848 = vmul.f32 %v820, %v845
        %v849 = vmul.f32 %v821, %v845
        %v850 = vmul.f32 %v826, %v845
        %v851 = vmul.f32 %v827, %v845
        %v852 = vmul.f32 %v828, %v845
        %v853 = vmul.f32 %v829, %v845
        %v854 = vlaneseq
        %v855 = vshrl.u32 %v854, 7
        %v856 = vsub.s32 0, %v855
        %v857 = vrot.slane %v744, %v856
        %v858 = vmul.f32 %v834, %v857
        %v859 = vmul.f32 %v835, %v857
        %v860 = vmul.f32 %v836, %v857
        %v861 = vmul.f32 %v837, %v857
        %v862 = vmul.f32 %v838, %v857
        %v863 = vmul.f32 %v839, %v857
        %v864 = vmul.f32 %v840, %v857
        %v865 = vmul.f32 %v841, %v857
        %v866 = vmul.f32 %v846, %v857
        %v867 = vmul.f32 %v847, %v857
        %v868 = vmul.f32 %v848, %v857
        %v869 = vmul.f32 %v849, %v857
        %v870 = vmul.f32 %v850, %v857
        %v871 = vmul.f32 %v851, %v857
        %v872 = vmul.f32 %v852, %v857
        %v873 = vmul.f32 %v853, %v857
        %v874 = vlaneseq
        %v875 = vshrl.u32 %v874, 7
        %v876 = vsub.s32 0, %v875
        %v877 = vrot.slane %v743, %v876
        %v878 = vmul.f32 %v834, %v877
        %v879 = vmul.f32 %v835, %v877
        %v880 = vmul.f32 %v836, %v877
        %v881 = vmul.f32 %v837, %v877
        %v882 = vmul.f32 %v838, %v877
        %v883 = vmul.f32 %v839, %v877
        %v884 = vmul.f32 %v840, %v877
        %v885 = vmul.f32 %v841, %v877
        %v886 = vmul.f32 %v846, %v877
        %v887 = vmul.f32 %v847, %v877
        %v888 = vmul.f32 %v848, %v877
        %v889 = vmul.f32 %v849, %v877
        %v890 = vmul.f32 %v850, %v877
        %v891 = vmul.f32 %v851, %v877
        %v892 = vmul.f32 %v852, %v877
        %v893 = vmul.f32 %v853, %v877
        %v894 = vld [vmem:[%s5] sm:$0xff]
        %v895 = vld [vmem:[%s5 + $0x8] sm:$0xff]
        %v896 = vld [vmem:[%s5 + $0x10] sm:$0xff]
        %v897 = vld [vmem:[%s5 + $0x18] sm:$0xff]
        %v898 = vld [vmem:[%s5 + $0x20] sm:$0xff]
        %v899 = vld [vmem:[%s5 + $0x28] sm:$0xff]
        %v900 = vld [vmem:[%s5 + $0x30] sm:$0xff]
        %v901 = vld [vmem:[%s5 + $0x38] sm:$0xff]
        %v902 = vld [vmem:[%s5 + $0x40] sm:$0xff]
        %v903 = vld [vmem:[%s5 + $0x48] sm:$0xff]
        %v904 = vld [vmem:[%s5 + $0x50] sm:$0xff]
        %v905 = vld [vmem:[%s5 + $0x58] sm:$0xff]
        %v906 = vld [vmem:[%s5 + $0x60] sm:$0xff]
        %v907 = vld [vmem:[%s5 + $0x68] sm:$0xff]
        %v908 = vld [vmem:[%s5 + $0x70] sm:$0xff]
        %v909 = vld [vmem:[%s5 + $0x78] sm:$0xff]
        %v910 = vld [vmem:[%s5 + $0x80] sm:$0xff]
        %v911 = vld [vmem:[%s5 + $0x88] sm:$0xff]
        %v912 = vld [vmem:[%s5 + $0x90] sm:$0xff]
        %v913 = vld [vmem:[%s5 + $0x98] sm:$0xff]
        %v914 = vld [vmem:[%s5 + $0xa0] sm:$0xff]
        %v915 = vld [vmem:[%s5 + $0xa8] sm:$0xff]
        %v916 = vld [vmem:[%s5 + $0xb0] sm:$0xff]
        %v917 = vld [vmem:[%s5 + $0xb8] sm:$0xff]
        %v918 = vld [vmem:[%s5 + $0xc0] sm:$0xff]
        %v919 = vld [vmem:[%s5 + $0xc8] sm:$0xff]
        %v920 = vld [vmem:[%s5 + $0xd0] sm:$0xff]
        %v921 = vld [vmem:[%s5 + $0xd8] sm:$0xff]
        %v922 = vld [vmem:[%s5 + $0xe0] sm:$0xff]
        %v923 = vld [vmem:[%s5 + $0xe8] sm:$0xff]
        %v924 = vld [vmem:[%s5 + $0xf0] sm:$0xff]
        %v925 = vld [vmem:[%s5 + $0xf8] sm:$0xff]
        %v927 = vsel %vm612, %v894, 0
        %v930 = vsel %vm612, %v895, 0
        %v933 = vsel %vm612, %v896, 0
        %v936 = vsel %vm612, %v897, 0
        %v939 = vsel %vm612, %v898, 0
        %v942 = vsel %vm612, %v899, 0
        %v945 = vsel %vm612, %v900, 0
        %v948 = vsel %vm612, %v901, 0
        %v951 = vsel %vm612, %v902, 0
        %v954 = vsel %vm612, %v903, 0
        %v957 = vsel %vm612, %v904, 0
        %v960 = vsel %vm612, %v905, 0
        %v963 = vsel %vm612, %v906, 0
        %v966 = vsel %vm612, %v907, 0
        %v969 = vsel %vm612, %v908, 0
        %v972 = vsel %vm612, %v909, 0
        %v975 = vsel %vm612, %v910, 0
        %v978 = vsel %vm612, %v911, 0
        %v981 = vsel %vm612, %v912, 0
        %v984 = vsel %vm612, %v913, 0
        %v987 = vsel %vm612, %v914, 0
        %v990 = vsel %vm612, %v915, 0
        %v993 = vsel %vm612, %v916, 0
        %v996 = vsel %vm612, %v917, 0
        %v999 = vsel %vm612, %v918, 0
        %v1002 = vsel %vm612, %v919, 0
        %v1005 = vsel %vm612, %v920, 0
        %v1008 = vsel %vm612, %v921, 0
        %v1011 = vsel %vm612, %v922, 0
        %v1014 = vsel %vm612, %v923, 0
        %v1017 = vsel %vm612, %v924, 0
        %v1020 = vsel %vm612, %v925, 0
        %1022 = vmatprep.subr.mxu0 0.0
        %1023 = vmatpush1.msra.mxu0 0.0
        %1024 = vmatprep.subr.mxu0 0.0
        %1025 = vmatpush1.msra.mxu0 0.0
        %1026 = vmatprep.subr.mxu0 0.0
        %1027 = vmatpush1.msra.mxu0 0.0
        %1028 = vmatprep.subr.mxu0 0.0
        %1029 = vmatpush1.msra.mxu0 0.0
        %1030 = vmatprep.subr.mxu0 0.0
        %1031 = vmatpush1.msra.mxu0 0.0
        %1032 = vmatprep.subr.mxu0 0.0
        %1033 = vmatpush1.msra.mxu0 0.0
        %1034 = vmatprep.subr.mxu0 0.0
        %1035 = vmatpush1.msra.mxu0 0.0
        %1036 = vmatprep.subr.mxu0 0.0
        %1037 = vmatpush1.msra.mxu0 0.0
        %1038 = vmatprep.subr.mxu0 0.0
        %1039 = vmatpush1.msra.mxu0 0.0
        %1040 = vmatprep.subr.mxu0 0.0
        %1041 = vmatpush1.msra.mxu0 0.0
        %1042 = vmatprep.subr.mxu0 0.0
        %1043 = vmatpush1.msra.mxu0 0.0
        %1044 = vmatprep.subr.mxu0 0.0
        %1045 = vmatpush1.msra.mxu0 0.0
        %1046 = vmatprep.subr.mxu0 0.0
        %1047 = vmatpush1.msra.mxu0 0.0
        %1048 = vmatprep.subr.mxu0 0.0
        %1049 = vmatpush1.msra.mxu0 0.0
        %1050 = vmatprep.subr.mxu0 0.0
        %1051 = vmatpush1.msra.mxu0 0.0
        %1052 = vmatprep.subr.mxu0 0.0
        %1053 = vmatpush1.msra.mxu0 %v731
        %1054 = vmatprep.subr.mxu0 0.0
        %1055 = vmatpush2.msra.mxu0 0.0
        %1056 = vmatprep.subr.mxu0 0.0
        %1057 = vmatpush2.msra.mxu0 0.0
        %1058 = vmatprep.subr.mxu0 0.0
        %1059 = vmatpush2.msra.mxu0 0.0
        %1060 = vmatprep.subr.mxu0 0.0
        %1061 = vmatpush2.msra.mxu0 0.0
        %1062 = vmatprep.subr.mxu0 0.0
        %1063 = vmatpush2.msra.mxu0 0.0
        %1064 = vmatprep.subr.mxu0 0.0
        %1065 = vmatpush2.msra.mxu0 0.0
        %1066 = vmatprep.subr.mxu0 0.0
        %1067 = vmatpush2.msra.mxu0 0.0
        %1068 = vmatprep.subr.mxu0 0.0
        %1069 = vmatpush2.msra.mxu0 0.0
        %1070 = vmatprep.subr.mxu0 0.0
        %1071 = vmatpush2.msra.mxu0 0.0
        %1072 = vmatprep.subr.mxu0 0.0
        %1073 = vmatpush2.msra.mxu0 0.0
        %1074 = vmatprep.subr.mxu0 0.0
        %1075 = vmatpush2.msra.mxu0 0.0
        %1076 = vmatprep.subr.mxu0 0.0
        %1077 = vmatpush2.msra.mxu0 0.0
        %1078 = vmatprep.subr.mxu0 0.0
        %1079 = vmatpush2.msra.mxu0 0.0
        %1080 = vmatprep.subr.mxu0 0.0
        %1081 = vmatpush2.msra.mxu0 0.0
        %1082 = vmatprep.subr.mxu0 0.0
        %1083 = vmatpush2.msra.mxu0 0.0
        %1084 = vmatprep.subr.mxu0 0.0
        %1085 = vmatpush2.msra.mxu0 0.0
        %1086 = vmatprep.mubr.f32.mxu0 0.0
        %1087 = vmatmul.mubr.f32.gmra.mxu0 %v927
        %v1088 = vpop.f32.mrf.mxu0
        %v1089 = vadd.f32 0.0, %v1088
        %v1090 = vpop.f32.mrf.mxu0
        %1091 = vmatprep.mubr.f32.mxu0 0.0
        %1092 = vmatmul.mubr.f32.gmra.mxu0 %v930
        %v1093 = vpop.f32.mrf.mxu0
        %v1094 = vadd.f32 0.0, %v1093
        %v1095 = vpop.f32.mrf.mxu0
        %1096 = vmatprep.mubr.f32.mxu0 0.0
        %1097 = vmatmul.mubr.f32.gmra.mxu0 %v933
        %v1098 = vpop.f32.mrf.mxu0
        %v1099 = vadd.f32 0.0, %v1098
        %v1100 = vpop.f32.mrf.mxu0
        %1101 = vmatprep.mubr.f32.mxu0 0.0
        %1102 = vmatmul.mubr.f32.gmra.mxu0 %v936
        %v1103 = vpop.f32.mrf.mxu0
        %v1104 = vadd.f32 0.0, %v1103
        %v1105 = vpop.f32.mrf.mxu0
        %1106 = vmatprep.mubr.f32.mxu0 0.0
        %1107 = vmatmul.mubr.f32.gmra.mxu0 %v939
        %v1108 = vpop.f32.mrf.mxu0
        %v1109 = vadd.f32 0.0, %v1108
        %v1110 = vpop.f32.mrf.mxu0
        %1111 = vmatprep.mubr.f32.mxu0 0.0
        %1112 = vmatmul.mubr.f32.gmra.mxu0 %v942
        %v1113 = vpop.f32.mrf.mxu0
        %v1114 = vadd.f32 0.0, %v1113
        %v1115 = vpop.f32.mrf.mxu0
        %1116 = vmatprep.mubr.f32.mxu0 0.0
        %1117 = vmatmul.mubr.f32.gmra.mxu0 %v945
        %v1118 = vpop.f32.mrf.mxu0
        %v1119 = vadd.f32 0.0, %v1118
        %v1120 = vpop.f32.mrf.mxu0
        %1121 = vmatprep.mubr.f32.mxu0 0.0
        %1122 = vmatmul.mubr.f32.gmra.mxu0 %v948
        %v1123 = vpop.f32.mrf.mxu0
        %v1124 = vadd.f32 0.0, %v1123
        %v1125 = vpop.f32.mrf.mxu0
        %1126 = vmatprep.mubr.f32.mxu0 0.0
        %1127 = vmatmul.mubr.f32.gmra.mxu0 %v951
        %v1128 = vpop.f32.mrf.mxu0
        %v1129 = vadd.f32 0.0, %v1128
        %v1130 = vpop.f32.mrf.mxu0
        %1131 = vmatprep.mubr.f32.mxu0 0.0
        %1132 = vmatmul.mubr.f32.gmra.mxu0 %v954
        %v1133 = vpop.f32.mrf.mxu0
        %v1134 = vadd.f32 0.0, %v1133
        %v1135 = vpop.f32.mrf.mxu0
        %1136 = vmatprep.mubr.f32.mxu0 0.0
        %1137 = vmatmul.mubr.f32.gmra.mxu0 %v957
        %v1138 = vpop.f32.mrf.mxu0
        %v1139 = vadd.f32 0.0, %v1138
        %v1140 = vpop.f32.mrf.mxu0
        %1141 = vmatprep.mubr.f32.mxu0 0.0
        %1142 = vmatmul.mubr.f32.gmra.mxu0 %v960
        %v1143 = vpop.f32.mrf.mxu0
        %v1144 = vadd.f32 0.0, %v1143
        %v1145 = vpop.f32.mrf.mxu0
        %1146 = vmatprep.mubr.f32.mxu0 0.0
        %1147 = vmatmul.mubr.f32.gmra.mxu0 %v963
        %v1148 = vpop.f32.mrf.mxu0
        %v1149 = vadd.f32 0.0, %v1148
        %v1150 = vpop.f32.mrf.mxu0
        %1151 = vmatprep.mubr.f32.mxu0 0.0
        %1152 = vmatmul.mubr.f32.gmra.mxu0 %v966
        %v1153 = vpop.f32.mrf.mxu0
        %v1154 = vadd.f32 0.0, %v1153
        %v1155 = vpop.f32.mrf.mxu0
        %1156 = vmatprep.mubr.f32.mxu0 0.0
        %1157 = vmatmul.mubr.f32.gmra.mxu0 %v969
        %v1158 = vpop.f32.mrf.mxu0
        %v1159 = vadd.f32 0.0, %v1158
        %v1160 = vpop.f32.mrf.mxu0
        %1161 = vmatprep.mubr.f32.mxu0 0.0
        %1162 = vmatmul.mubr.f32.gmra.mxu0 %v972
        %v1163 = vpop.f32.mrf.mxu0
        %v1164 = vadd.f32 0.0, %v1163
        %v1165 = vpop.f32.mrf.mxu0
        %1166 = vmatprep.mubr.f32.mxu0 0.0
        %1167 = vmatmul.mubr.f32.gmra.mxu0 %v975
        %v1168 = vpop.f32.mrf.mxu0
        %v1169 = vadd.f32 0.0, %v1168
        %v1170 = vpop.f32.mrf.mxu0
        %1171 = vmatprep.mubr.f32.mxu0 0.0
        %1172 = vmatmul.mubr.f32.gmra.mxu0 %v978
        %v1173 = vpop.f32.mrf.mxu0
        %v1174 = vadd.f32 0.0, %v1173
        %v1175 = vpop.f32.mrf.mxu0
        %1176 = vmatprep.mubr.f32.mxu0 0.0
        %1177 = vmatmul.mubr.f32.gmra.mxu0 %v981
        %v1178 = vpop.f32.mrf.mxu0
        %v1179 = vadd.f32 0.0, %v1178
        %v1180 = vpop.f32.mrf.mxu0
        %1181 = vmatprep.mubr.f32.mxu0 0.0
        %1182 = vmatmul.mubr.f32.gmra.mxu0 %v984
        %v1183 = vpop.f32.mrf.mxu0
        %v1184 = vadd.f32 0.0, %v1183
        %v1185 = vpop.f32.mrf.mxu0
        %1186 = vmatprep.mubr.f32.mxu0 0.0
        %1187 = vmatmul.mubr.f32.gmra.mxu0 %v987
        %v1188 = vpop.f32.mrf.mxu0
        %v1189 = vadd.f32 0.0, %v1188
        %v1190 = vpop.f32.mrf.mxu0
        %1191 = vmatprep.mubr.f32.mxu0 0.0
        %1192 = vmatmul.mubr.f32.gmra.mxu0 %v990
        %v1193 = vpop.f32.mrf.mxu0
        %v1194 = vadd.f32 0.0, %v1193
        %v1195 = vpop.f32.mrf.mxu0
        %1196 = vmatprep.mubr.f32.mxu0 0.0
        %1197 = vmatmul.mubr.f32.gmra.mxu0 %v993
        %v1198 = vpop.f32.mrf.mxu0
        %v1199 = vadd.f32 0.0, %v1198
        %v1200 = vpop.f32.mrf.mxu0
        %1201 = vmatprep.mubr.f32.mxu0 0.0
        %1202 = vmatmul.mubr.f32.gmra.mxu0 %v996
        %v1203 = vpop.f32.mrf.mxu0
        %v1204 = vadd.f32 0.0, %v1203
        %v1205 = vpop.f32.mrf.mxu0
        %1206 = vmatprep.mubr.f32.mxu0 0.0
        %1207 = vmatmul.mubr.f32.gmra.mxu0 %v999
        %v1208 = vpop.f32.mrf.mxu0
        %v1209 = vadd.f32 0.0, %v1208
        %v1210 = vpop.f32.mrf.mxu0
        %1211 = vmatprep.mubr.f32.mxu0 0.0
        %1212 = vmatmul.mubr.f32.gmra.mxu0 %v1002
        %v1213 = vpop.f32.mrf.mxu0
        %v1214 = vadd.f32 0.0, %v1213
        %v1215 = vpop.f32.mrf.mxu0
        %1216 = vmatprep.mubr.f32.mxu0 0.0
        %1217 = vmatmul.mubr.f32.gmra.mxu0 %v1005
        %v1218 = vpop.f32.mrf.mxu0
        %v1219 = vadd.f32 0.0, %v1218
        %v1220 = vpop.f32.mrf.mxu0
        %1221 = vmatprep.mubr.f32.mxu0 0.0
        %1222 = vmatmul.mubr.f32.gmra.mxu0 %v1008
        %v1223 = vpop.f32.mrf.mxu0
        %v1224 = vadd.f32 0.0, %v1223
        %v1225 = vpop.f32.mrf.mxu0
        %1226 = vmatprep.mubr.f32.mxu0 0.0
        %1227 = vmatmul.mubr.f32.gmra.mxu0 %v1011
        %v1228 = vpop.f32.mrf.mxu0
        %v1229 = vadd.f32 0.0, %v1228
        %v1230 = vpop.f32.mrf.mxu0
        %1231 = vmatprep.mubr.f32.mxu0 0.0
        %1232 = vmatmul.mubr.f32.gmra.mxu0 %v1014
        %v1233 = vpop.f32.mrf.mxu0
        %v1234 = vadd.f32 0.0, %v1233
        %v1235 = vpop.f32.mrf.mxu0
        %1236 = vmatprep.mubr.f32.mxu0 0.0
        %1237 = vmatmul.mubr.f32.gmra.mxu0 %v1017
        %v1238 = vpop.f32.mrf.mxu0
        %v1239 = vadd.f32 0.0, %v1238
        %v1240 = vpop.f32.mrf.mxu0
        %1241 = vmatprep.mubr.f32.mxu0 0.0
        %1242 = vmatmul.mubr.f32.gmra.mxu0 %v1020
        %v1243 = vpop.f32.mrf.mxu0
        %v1244 = vadd.f32 0.0, %v1243
        %v1245 = vpop.f32.mrf.mxu0
        %1246 = vdwg.mxu0
        %v1247 = vsub.f32 %v1089, %v753
        %v1248 = vsub.f32 %v1094, %v753
        %v1249 = vsub.f32 %v1099, %v753
        %v1250 = vsub.f32 %v1104, %v753
        %v1251 = vsub.f32 %v1109, %v753
        %v1252 = vsub.f32 %v1114, %v753
        %v1253 = vsub.f32 %v1119, %v753
        %v1254 = vsub.f32 %v1124, %v753
        %v1255 = vsub.f32 %v1129, %v753
        %v1256 = vsub.f32 %v1134, %v753
        %v1257 = vsub.f32 %v1139, %v753
        %v1258 = vsub.f32 %v1144, %v753
        %v1259 = vsub.f32 %v1149, %v753
        %v1260 = vsub.f32 %v1154, %v753
        %v1261 = vsub.f32 %v1159, %v753
        %v1262 = vsub.f32 %v1164, %v753
        %v1263 = vsub.f32 %v1169, %v753
        %v1264 = vsub.f32 %v1174, %v753
        %v1265 = vsub.f32 %v1179, %v753
        %v1266 = vsub.f32 %v1184, %v753
        %v1267 = vsub.f32 %v1189, %v753
        %v1268 = vsub.f32 %v1194, %v753
        %v1269 = vsub.f32 %v1199, %v753
        %v1270 = vsub.f32 %v1204, %v753
        %v1271 = vsub.f32 %v1209, %v753
        %v1272 = vsub.f32 %v1214, %v753
        %v1273 = vsub.f32 %v1219, %v753
        %v1274 = vsub.f32 %v1224, %v753
        %v1275 = vsub.f32 %v1229, %v753
        %v1276 = vsub.f32 %v1234, %v753
        %v1277 = vsub.f32 %v1239, %v753
        %v1278 = vsub.f32 %v1244, %v753
        %v1279 = vmax.f32 %v1247, -11.512925
        %v1280 = vmax.f32 %v1248, -11.512925
        %v1281 = vmax.f32 %v1249, -11.512925
        %v1282 = vmax.f32 %v1250, -11.512925
        %v1283 = vmax.f32 %v1251, -11.512925
        %v1284 = vmax.f32 %v1252, -11.512925
        %v1285 = vmax.f32 %v1253, -11.512925
        %v1286 = vmax.f32 %v1254, -11.512925
        %v1287 = vmax.f32 %v1255, -11.512925
        %v1288 = vmax.f32 %v1256, -11.512925
        %v1289 = vmax.f32 %v1257, -11.512925
        %v1290 = vmax.f32 %v1258, -11.512925
        %v1291 = vmax.f32 %v1259, -11.512925
        %v1292 = vmax.f32 %v1260, -11.512925
        %v1293 = vmax.f32 %v1261, -11.512925
        %v1294 = vmax.f32 %v1262, -11.512925
        %v1295 = vmax.f32 %v1263, -11.512925
        %v1296 = vmax.f32 %v1264, -11.512925
        %v1297 = vmax.f32 %v1265, -11.512925
        %v1298 = vmax.f32 %v1266, -11.512925
        %v1299 = vmax.f32 %v1267, -11.512925
        %v1300 = vmax.f32 %v1268, -11.512925
        %v1301 = vmax.f32 %v1269, -11.512925
        %v1302 = vmax.f32 %v1270, -11.512925
        %v1303 = vmax.f32 %v1271, -11.512925
        %v1304 = vmax.f32 %v1272, -11.512925
        %v1305 = vmax.f32 %v1273, -11.512925
        %v1306 = vmax.f32 %v1274, -11.512925
        %v1307 = vmax.f32 %v1275, -11.512925
        %v1308 = vmax.f32 %v1276, -11.512925
        %v1309 = vmax.f32 %v1277, -11.512925
        %v1310 = vmax.f32 %v1278, -11.512925
        %v1311 = vld [vmem:[%s454] sm:$0xff]
        %v1312 = vld [vmem:[%s454 + $0x8] sm:$0xff]
        %v1313 = vld [vmem:[%s454 + $0x10] sm:$0xff]
        %v1314 = vld [vmem:[%s454 + $0x18] sm:$0xff]
        %v1315 = vld [vmem:[%s454 + $0x20] sm:$0xff]
        %v1316 = vld [vmem:[%s454 + $0x28] sm:$0xff]
        %v1317 = vld [vmem:[%s454 + $0x30] sm:$0xff]
        %v1318 = vld [vmem:[%s454 + $0x38] sm:$0xff]
        %v1319 = vld [vmem:[%s454 + $0x40] sm:$0xff]
        %v1320 = vld [vmem:[%s454 + $0x48] sm:$0xff]
        %v1321 = vld [vmem:[%s454 + $0x50] sm:$0xff]
        %v1322 = vld [vmem:[%s454 + $0x58] sm:$0xff]
        %v1323 = vld [vmem:[%s454 + $0x60] sm:$0xff]
        %v1324 = vld [vmem:[%s454 + $0x68] sm:$0xff]
        %v1325 = vld [vmem:[%s454 + $0x70] sm:$0xff]
        %v1326 = vld [vmem:[%s454 + $0x78] sm:$0xff]
        %v1327 = vld [vmem:[%s454 + $0x80] sm:$0xff]
        %v1328 = vld [vmem:[%s454 + $0x88] sm:$0xff]
        %v1329 = vld [vmem:[%s454 + $0x90] sm:$0xff]
        %v1330 = vld [vmem:[%s454 + $0x98] sm:$0xff]
        %v1331 = vld [vmem:[%s454 + $0xa0] sm:$0xff]
        %v1332 = vld [vmem:[%s454 + $0xa8] sm:$0xff]
        %v1333 = vld [vmem:[%s454 + $0xb0] sm:$0xff]
        %v1334 = vld [vmem:[%s454 + $0xb8] sm:$0xff]
        %v1335 = vld [vmem:[%s454 + $0xc0] sm:$0xff]
        %v1336 = vld [vmem:[%s454 + $0xc8] sm:$0xff]
        %v1337 = vld [vmem:[%s454 + $0xd0] sm:$0xff]
        %v1338 = vld [vmem:[%s454 + $0xd8] sm:$0xff]
        %v1339 = vld [vmem:[%s454 + $0xe0] sm:$0xff]
        %v1340 = vld [vmem:[%s454 + $0xe8] sm:$0xff]
        %v1341 = vld [vmem:[%s454 + $0xf0] sm:$0xff]
        %v1342 = vld [vmem:[%s454 + $0xf8] sm:$0xff]
        %1343 = vadd.xlane.f32.xlu0 %v858
        %v1344 = vpop.xlane.xlu0 %1343
        %1345 = vadd.xlane.f32.xlu0 %v859
        %v1346 = vpop.xlane.xlu0 %1345
        %1347 = vadd.xlane.f32.xlu0 %v860
        %v1348 = vpop.xlane.xlu0 %1347
        %1349 = vadd.xlane.f32.xlu0 %v861
        %v1350 = vpop.xlane.xlu0 %1349
        %1351 = vadd.xlane.f32.xlu0 %v862
        %v1352 = vpop.xlane.xlu0 %1351
        %1353 = vadd.xlane.f32.xlu0 %v863
        %v1354 = vpop.xlane.xlu0 %1353
        %1355 = vadd.xlane.f32.xlu0 %v864
        %v1356 = vpop.xlane.xlu0 %1355
        %1357 = vadd.xlane.f32.xlu0 %v865
        %v1358 = vpop.xlane.xlu0 %1357
        %1359 = vadd.xlane.f32.xlu0 %v866
        %v1360 = vpop.xlane.xlu0 %1359
        %1361 = vadd.xlane.f32.xlu0 %v867
        %v1362 = vpop.xlane.xlu0 %1361
        %1363 = vadd.xlane.f32.xlu0 %v868
        %v1364 = vpop.xlane.xlu0 %1363
        %1365 = vadd.xlane.f32.xlu0 %v869
        %v1366 = vpop.xlane.xlu0 %1365
        %1367 = vadd.xlane.f32.xlu0 %v870
        %v1368 = vpop.xlane.xlu0 %1367
        %1369 = vadd.xlane.f32.xlu0 %v871
        %v1370 = vpop.xlane.xlu0 %1369
        %1371 = vadd.xlane.f32.xlu0 %v872
        %v1372 = vpop.xlane.xlu0 %1371
        %1373 = vadd.xlane.f32.xlu0 %v873
        %v1374 = vpop.xlane.xlu0 %1373
        %1375 = vadd.xlane.f32.xlu0 %v878
        %v1376 = vpop.xlane.xlu0 %1375
        %1377 = vadd.xlane.f32.xlu0 %v879
        %v1378 = vpop.xlane.xlu0 %1377
        %1379 = vadd.xlane.f32.xlu0 %v880
        %v1380 = vpop.xlane.xlu0 %1379
        %1381 = vadd.xlane.f32.xlu0 %v881
        %v1382 = vpop.xlane.xlu0 %1381
        %1383 = vadd.xlane.f32.xlu0 %v882
        %v1384 = vpop.xlane.xlu0 %1383
        %1385 = vadd.xlane.f32.xlu0 %v883
        %v1386 = vpop.xlane.xlu0 %1385
        %1387 = vadd.xlane.f32.xlu0 %v884
        %v1388 = vpop.xlane.xlu0 %1387
        %1389 = vadd.xlane.f32.xlu0 %v885
        %v1390 = vpop.xlane.xlu0 %1389
        %1391 = vadd.xlane.f32.xlu0 %v886
        %v1392 = vpop.xlane.xlu0 %1391
        %1393 = vadd.xlane.f32.xlu0 %v887
        %v1394 = vpop.xlane.xlu0 %1393
        %1395 = vadd.xlane.f32.xlu0 %v888
        %v1396 = vpop.xlane.xlu0 %1395
        %1397 = vadd.xlane.f32.xlu0 %v889
        %v1398 = vpop.xlane.xlu0 %1397
        %1399 = vadd.xlane.f32.xlu0 %v890
        %v1400 = vpop.xlane.xlu0 %1399
        %1401 = vadd.xlane.f32.xlu0 %v891
        %v1402 = vpop.xlane.xlu0 %1401
        %1403 = vadd.xlane.f32.xlu0 %v892
        %v1404 = vpop.xlane.xlu0 %1403
        %1405 = vadd.xlane.f32.xlu0 %v893
        %v1406 = vpop.xlane.xlu0 %1405
        %v1407 = vadd.f32 %v1311, %v1344
        %v1408 = vadd.f32 %v1312, %v1346
        %v1409 = vadd.f32 %v1313, %v1348
        %v1410 = vadd.f32 %v1314, %v1350
        %v1411 = vadd.f32 %v1315, %v1352
        %v1412 = vadd.f32 %v1316, %v1354
        %v1413 = vadd.f32 %v1317, %v1356
        %v1414 = vadd.f32 %v1318, %v1358
        %v1415 = vadd.f32 %v1319, %v1360
        %v1416 = vadd.f32 %v1320, %v1362
        %v1417 = vadd.f32 %v1321, %v1364
        %v1418 = vadd.f32 %v1322, %v1366
        %v1419 = vadd.f32 %v1323, %v1368
        %v1420 = vadd.f32 %v1324, %v1370
        %v1421 = vadd.f32 %v1325, %v1372
        %v1422 = vadd.f32 %v1326, %v1374
        %v1423 = vadd.f32 %v1327, %v1376
        %v1424 = vadd.f32 %v1328, %v1378
        %v1425 = vadd.f32 %v1329, %v1380
        %v1426 = vadd.f32 %v1330, %v1382
        %v1427 = vadd.f32 %v1331, %v1384
        %v1428 = vadd.f32 %v1332, %v1386
        %v1429 = vadd.f32 %v1333, %v1388
        %v1430 = vadd.f32 %v1334, %v1390
        %v1431 = vadd.f32 %v1335, %v1392
        %v1432 = vadd.f32 %v1336, %v1394
        %v1433 = vadd.f32 %v1337, %v1396
        %v1434 = vadd.f32 %v1338, %v1398
        %v1435 = vadd.f32 %v1339, %v1400
        %v1436 = vadd.f32 %v1340, %v1402
        %v1437 = vadd.f32 %v1341, %v1404
        %v1438 = vadd.f32 %v1342, %v1406
        %vm1439 = vcmask 7168
        %1440 = vst.msk [vmem:[%s454] sm:$0xff] %vm1439, %v1407
        %1441 = vst.msk [vmem:[%s454 + $0x8] sm:$0xff] %vm1439, %v1408
        %1442 = vst.msk [vmem:[%s454 + $0x10] sm:$0xff] %vm1439, %v1409
        %1443 = vst.msk [vmem:[%s454 + $0x18] sm:$0xff] %vm1439, %v1410
        %1444 = vst.msk [vmem:[%s454 + $0x20] sm:$0xff] %vm1439, %v1411
        %1445 = vst.msk [vmem:[%s454 + $0x28] sm:$0xff] %vm1439, %v1412
        %1446 = vst.msk [vmem:[%s454 + $0x30] sm:$0xff] %vm1439, %v1413
        %1447 = vst.msk [vmem:[%s454 + $0x38] sm:$0xff] %vm1439, %v1414
        %1448 = vst.msk [vmem:[%s454 + $0x40] sm:$0xff] %vm1439, %v1415
        %1449 = vst.msk [vmem:[%s454 + $0x48] sm:$0xff] %vm1439, %v1416
        %1450 = vst.msk [vmem:[%s454 + $0x50] sm:$0xff] %vm1439, %v1417
        %1451 = vst.msk [vmem:[%s454 + $0x58] sm:$0xff] %vm1439, %v1418
        %1452 = vst.msk [vmem:[%s454 + $0x60] sm:$0xff] %vm1439, %v1419
        %1453 = vst.msk [vmem:[%s454 + $0x68] sm:$0xff] %vm1439, %v1420
        %1454 = vst.msk [vmem:[%s454 + $0x70] sm:$0xff] %vm1439, %v1421
        %1455 = vst.msk [vmem:[%s454 + $0x78] sm:$0xff] %vm1439, %v1422
        %1456 = vst.msk [vmem:[%s454 + $0x80] sm:$0xff] %vm1439, %v1423
        %1457 = vst.msk [vmem:[%s454 + $0x88] sm:$0xff] %vm1439, %v1424
        %1458 = vst.msk [vmem:[%s454 + $0x90] sm:$0xff] %vm1439, %v1425
        %1459 = vst.msk [vmem:[%s454 + $0x98] sm:$0xff] %vm1439, %v1426
        %1460 = vst.msk [vmem:[%s454 + $0xa0] sm:$0xff] %vm1439, %v1427
        %1461 = vst.msk [vmem:[%s454 + $0xa8] sm:$0xff] %vm1439, %v1428
        %1462 = vst.msk [vmem:[%s454 + $0xb0] sm:$0xff] %vm1439, %v1429
        %1463 = vst.msk [vmem:[%s454 + $0xb8] sm:$0xff] %vm1439, %v1430
        %1464 = vst.msk [vmem:[%s454 + $0xc0] sm:$0xff] %vm1439, %v1431
        %1465 = vst.msk [vmem:[%s454 + $0xc8] sm:$0xff] %vm1439, %v1432
        %1466 = vst.msk [vmem:[%s454 + $0xd0] sm:$0xff] %vm1439, %v1433
        %1467 = vst.msk [vmem:[%s454 + $0xd8] sm:$0xff] %vm1439, %v1434
        %1468 = vst.msk [vmem:[%s454 + $0xe0] sm:$0xff] %vm1439, %v1435
        %1469 = vst.msk [vmem:[%s454 + $0xe8] sm:$0xff] %vm1439, %v1436
        %1470 = vst.msk [vmem:[%s454 + $0xf0] sm:$0xff] %vm1439, %v1437
        %1471 = vst.msk [vmem:[%s454 + $0xf8] sm:$0xff] %vm1439, %v1438
        %v1472 = vmul.f32 %v858, %v1279
        %v1473 = vmul.f32 %v859, %v1280
        %v1474 = vmul.f32 %v860, %v1281
        %v1475 = vmul.f32 %v861, %v1282
        %v1476 = vmul.f32 %v862, %v1283
        %v1477 = vmul.f32 %v863, %v1284
        %v1478 = vmul.f32 %v864, %v1285
        %v1479 = vmul.f32 %v865, %v1286
        %v1480 = vmul.f32 %v866, %v1287
        %v1481 = vmul.f32 %v867, %v1288
        %v1482 = vmul.f32 %v868, %v1289
        %v1483 = vmul.f32 %v869, %v1290
        %v1484 = vmul.f32 %v870, %v1291
        %v1485 = vmul.f32 %v871, %v1292
        %v1486 = vmul.f32 %v872, %v1293
        %v1487 = vmul.f32 %v873, %v1294
        %v1488 = vmul.f32 %v878, %v1295
        %v1489 = vmul.f32 %v879, %v1296
        %v1490 = vmul.f32 %v880, %v1297
        %v1491 = vmul.f32 %v881, %v1298
        %v1492 = vmul.f32 %v882, %v1299
        %v1493 = vmul.f32 %v883, %v1300
        %v1494 = vmul.f32 %v884, %v1301
        %v1495 = vmul.f32 %v885, %v1302
        %v1496 = vmul.f32 %v886, %v1303
        %v1497 = vmul.f32 %v887, %v1304
        %v1498 = vmul.f32 %v888, %v1305
        %v1499 = vmul.f32 %v889, %v1306
        %v1500 = vmul.f32 %v890, %v1307
        %v1501 = vmul.f32 %v891, %v1308
        %v1502 = vmul.f32 %v892, %v1309
        %v1503 = vmul.f32 %v893, %v1310
        %v1504 = vld [vmem:[%s457] sm:$0x1]
        %1505 = vadd.xlane.f32.xlu0 %v1472
        %v1506 = vpop.xlane.xlu0 %1505
        %1507 = vadd.xlane.f32.xlu0 %v1473
        %v1508 = vpop.xlane.xlu0 %1507
        %1509 = vadd.xlane.f32.xlu0 %v1474
        %v1510 = vpop.xlane.xlu0 %1509
        %1511 = vadd.xlane.f32.xlu0 %v1475
        %v1512 = vpop.xlane.xlu0 %1511
        %1513 = vadd.xlane.f32.xlu0 %v1476
        %v1514 = vpop.xlane.xlu0 %1513
        %1515 = vadd.xlane.f32.xlu0 %v1477
        %v1516 = vpop.xlane.xlu0 %1515
        %1517 = vadd.xlane.f32.xlu0 %v1478
        %v1518 = vpop.xlane.xlu0 %1517
        %1519 = vadd.xlane.f32.xlu0 %v1479
        %v1520 = vpop.xlane.xlu0 %1519
        %1521 = vadd.xlane.f32.xlu0 %v1480
        %v1522 = vpop.xlane.xlu0 %1521
        %1523 = vadd.xlane.f32.xlu0 %v1481
        %v1524 = vpop.xlane.xlu0 %1523
        %1525 = vadd.xlane.f32.xlu0 %v1482
        %v1526 = vpop.xlane.xlu0 %1525
        %1527 = vadd.xlane.f32.xlu0 %v1483
        %v1528 = vpop.xlane.xlu0 %1527
        %1529 = vadd.xlane.f32.xlu0 %v1484
        %v1530 = vpop.xlane.xlu0 %1529
        %1531 = vadd.xlane.f32.xlu0 %v1485
        %v1532 = vpop.xlane.xlu0 %1531
        %1533 = vadd.xlane.f32.xlu0 %v1486
        %v1534 = vpop.xlane.xlu0 %1533
        %1535 = vadd.xlane.f32.xlu0 %v1487
        %v1536 = vpop.xlane.xlu0 %1535
        %1537 = vadd.xlane.f32.xlu0 %v1488
        %v1538 = vpop.xlane.xlu0 %1537
        %1539 = vadd.xlane.f32.xlu0 %v1489
        %v1540 = vpop.xlane.xlu0 %1539
        %1541 = vadd.xlane.f32.xlu0 %v1490
        %v1542 = vpop.xlane.xlu0 %1541
        %1543 = vadd.xlane.f32.xlu0 %v1491
        %v1544 = vpop.xlane.xlu0 %1543
        %1545 = vadd.xlane.f32.xlu0 %v1492
        %v1546 = vpop.xlane.xlu0 %1545
        %1547 = vadd.xlane.f32.xlu0 %v1493
        %v1548 = vpop.xlane.xlu0 %1547
        %1549 = vadd.xlane.f32.xlu0 %v1494
        %v1550 = vpop.xlane.xlu0 %1549
        %1551 = vadd.xlane.f32.xlu0 %v1495
        %v1552 = vpop.xlane.xlu0 %1551
        %1553 = vadd.xlane.f32.xlu0 %v1496
        %v1554 = vpop.xlane.xlu0 %1553
        %1555 = vadd.xlane.f32.xlu0 %v1497
        %v1556 = vpop.xlane.xlu0 %1555
        %1557 = vadd.xlane.f32.xlu0 %v1498
        %v1558 = vpop.xlane.xlu0 %1557
        %1559 = vadd.xlane.f32.xlu0 %v1499
        %v1560 = vpop.xlane.xlu0 %1559
        %1561 = vadd.xlane.f32.xlu0 %v1500
        %v1562 = vpop.xlane.xlu0 %1561
        %1563 = vadd.xlane.f32.xlu0 %v1501
        %v1564 = vpop.xlane.xlu0 %1563
        %1565 = vadd.xlane.f32.xlu0 %v1502
        %v1566 = vpop.xlane.xlu0 %1565
        %1567 = vadd.xlane.f32.xlu0 %v1503
        %v1568 = vpop.xlane.xlu0 %1567
        %v1569 = vadd.f32 %v1506, %v1508
        %v1570 = vadd.f32 %v1569, %v1510
        %v1571 = vadd.f32 %v1570, %v1512
        %v1572 = vadd.f32 %v1571, %v1514
        %v1573 = vadd.f32 %v1572, %v1516
        %v1574 = vadd.f32 %v1573, %v1518
        %v1575 = vadd.f32 %v1574, %v1520
        %v1576 = vadd.f32 %v1575, %v1522
        %v1577 = vadd.f32 %v1576, %v1524
        %v1578 = vadd.f32 %v1577, %v1526
        %v1579 = vadd.f32 %v1578, %v1528
        %v1580 = vadd.f32 %v1579, %v1530
        %v1581 = vadd.f32 %v1580, %v1532
        %v1582 = vadd.f32 %v1581, %v1534
        %v1583 = vadd.f32 %v1582, %v1536
        %v1584 = vadd.f32 %v1583, %v1538
        %v1585 = vadd.f32 %v1584, %v1540
        %v1586 = vadd.f32 %v1585, %v1542
        %v1587 = vadd.f32 %v1586, %v1544
        %v1588 = vadd.f32 %v1587, %v1546
        %v1589 = vadd.f32 %v1588, %v1548
        %v1590 = vadd.f32 %v1589, %v1550
        %v1591 = vadd.f32 %v1590, %v1552
        %v1592 = vadd.f32 %v1591, %v1554
        %v1593 = vadd.f32 %v1592, %v1556
        %v1594 = vadd.f32 %v1593, %v1558
        %v1595 = vadd.f32 %v1594, %v1560
        %v1596 = vadd.f32 %v1595, %v1562
        %v1597 = vadd.f32 %v1596, %v1564
        %v1598 = vadd.f32 %v1597, %v1566
        %v1599 = vadd.f32 %v1598, %v1568
        %v1600 = vrot.slane %v1599, 4
        %v1601 = vadd.f32 %v1599, %v1600
        %v1602 = vrot.slane %v1601, 2
        %v1603 = vadd.f32 %v1601, %v1602
        %v1604 = vrot.slane %v1603, 1
        %v1605 = vadd.f32 %v1603, %v1604
        %v1606 = vsub.f32 0.0, %v1605
        %v1607 = vadd.f32 %v1504, %v1606
        %vm1608 = vcmask 0
        %1609 = vst.msk [vmem:[%s457] sm:$0x1] %vm1608, %v1607
        %s1610 = sand.u32 %s198, 1
        %s1611 = sand.u32 %s198, 1
        %s1612 = smul.addr %s1611, 32
        %s1613 = scalar_lea.vmem [#allocation3], %s1612
        %p1614 = scmp.lt.s32.totalorder %s26, 1
        %s1615 = scalar_select %p1614, %s26, 1
        %p1616 = scmp.lt.s32.totalorder %s27, 1
        %s1617 = scalar_select %p1616, %s27, 1
        %s1618 = smul.addr %s1615, 2
        %s1619 = sadd.s32 %s1617, %s1618
        %s1620 = scalar_lea.vmem %s8, %s1619
        %p1621 = scmp.lt.s32.totalorder %s26, 1
        %s1622 = scalar_select %p1621, %s26, 1
        %s1623 = smul.addr %s1622, 32
        %s1624 = smul.addr %s1623, 8
        %s1625 = scalar_lea.vmem %s9, %s1624
        %p1626 = scmp.lt.s32.totalorder %s26, 1
        %s1627 = scalar_select %p1626, %s26, 1
        %s1628 = scalar_lea.vmem %s10, %s1627
        // Predicated region
        $region91: #{lfq_forward.1} parent=81 // pred_check
          %p1629 = pneg %p208
        $region92: #{lfq_forward.1} parent=81 // pred_check_branch
          %1631 = sbr.rel (%p1629) target = $region94
        $region93: #{lfq_forward.1} parent=81 // pred_region
          %s1632 = smul.addr %s26, 8
          %s1633 = sadd.s32 %s27, %s1632
          %s1634 = smul.addr %s1633, 8
          %s1635 = scalar_lea.vmem %s7, %s1634
          // Predicated region
          $region95: #{lfq_forward.1} parent=93 // pred_check
            _
          $region96: #{lfq_forward.1} parent=93 // pred_check_branch
            %1637 = sbr.rel (0) target = $region98
          $region97: #{lfq_forward.1} parent=93 // pred_region
            // Predicated region
            $region99: #{lfq_forward.1} parent=97 // pred_check
              _
            $region100: #{lfq_forward.1} parent=97 // pred_check_branch
              %1639 = sbr.rel (0) target = $region102
            $region101: #{lfq_forward.1} parent=97 // pred_region
              // Predicated region
              $region114: #{lfq_forward.1} parent=101 // pred_check
                _
              $region115: #{lfq_forward.1} parent=101 // pred_check_branch
                %1661 = sbr.rel (0) target = $region117
              $region116: #{lfq_forward.1} parent=101 // pred_region
                loop: start=0, step=1, limit=1
                $region118: #{lfq_forward.1} parent=116 // loop_pre_header
                  _
                $region119: #{lfq_forward.1} parent=116 // loop_header
                  %s1663 = sphi 0, %s1667
                  %p1664 = scmp.ge.s32.totalorder %s1663, 1
                  %s1668 = sphi %s1613, %s1613
                  %s1669 = sphi %s1635, %s1635
                $region120: #{lfq_forward.1} parent=116 // loop_header_branch
                  %1666 = sbr.rel (%p1664) target = $region124
                $region121: #{lfq_forward.1} parent=116 // loop_body
                  %v1670 = vld [vmem:[%s1668] sm:$0xff]
                  %1671 = vst [vmem:[%s1669] sm:$0xff] %v1670
                  %v1672 = vld [vmem:[%s1668 + $0x8] sm:$0xff]
                  %1673 = vst [vmem:[%s1669 + $0x10] sm:$0xff] %v1672
                  %v1674 = vld [vmem:[%s1668 + $0x10] sm:$0xff]
                  %1675 = vst [vmem:[%s1669 + $0x20] sm:$0xff] %v1674
                  %v1676 = vld [vmem:[%s1668 + $0x18] sm:$0xff]
                  %1677 = vst [vmem:[%s1669 + $0x30] sm:$0xff] %v1676
                $region122: #{lfq_forward.1} parent=116 // loop_footer
                  %s1667 = sadd.s32 1, %s1663
                $region123: #{lfq_forward.1} parent=116 // loop_footer_branch
                  %1662 = sbr.rel target = $region119
                $region124: #{lfq_forward.1} parent=116 // loop_exit
                  _
              $region117: #{lfq_forward.1} parent=101 // pred_fallthru
                _
              // Predicated region
              $region125: #{lfq_forward.1} parent=101 // pred_check
                _
              $region126: #{lfq_forward.1} parent=101 // pred_check_branch
                %1679 = sbr.rel target = $region128
              $region127: #{lfq_forward.1} parent=101 // pred_region
                _
              $region128: #{lfq_forward.1} parent=101 // pred_fallthru
                _
            $region102: #{lfq_forward.1} parent=97 // pred_fallthru
              _
            // Predicated region
            $region103: #{lfq_forward.1} parent=97 // pred_check
              _
            $region104: #{lfq_forward.1} parent=97 // pred_check_branch
              %1641 = sbr.rel target = $region106
            $region105: #{lfq_forward.1} parent=97 // pred_region
              %s1643 = ssub.s32 256, 1
              loop: start=0, step=1, limit=1
              $region107: #{lfq_forward.1} parent=105 // loop_pre_header
                _
              $region108: #{lfq_forward.1} parent=105 // loop_header
                %s1645 = sphi 0, %s1649
                %p1646 = scmp.ge.s32.totalorder %s1645, 1
                %s1650 = sphi %s1613, %s1613
                %s1651 = sphi %s1635, %s1635
              $region109: #{lfq_forward.1} parent=105 // loop_header_branch
                %1648 = sbr.rel (%p1646) target = $region113
              $region110: #{lfq_forward.1} parent=105 // loop_body
                %v1652 = vld [vmem:[%s1650] sm:%s1643]
                %1653 = vst [vmem:[%s1651] sm:%s1643] %v1652
                %v1654 = vld [vmem:[%s1650 + $0x8] sm:%s1643]
                %1655 = vst [vmem:[%s1651 + $0x10] sm:%s1643] %v1654
                %v1656 = vld [vmem:[%s1650 + $0x10] sm:%s1643]
                %1657 = vst [vmem:[%s1651 + $0x20] sm:%s1643] %v1656
                %v1658 = vld [vmem:[%s1650 + $0x18] sm:%s1643]
                %1659 = vst [vmem:[%s1651 + $0x30] sm:%s1643] %v1658
              $region111: #{lfq_forward.1} parent=105 // loop_footer
                %s1649 = sadd.s32 1, %s1645
              $region112: #{lfq_forward.1} parent=105 // loop_footer_branch
                %1644 = sbr.rel target = $region108
              $region113: #{lfq_forward.1} parent=105 // loop_exit
                _
            $region106: #{lfq_forward.1} parent=97 // pred_fallthru
              _
          $region98: #{lfq_forward.1} parent=93 // pred_fallthru
            _
          %1680 = vnop
        $region94: #{lfq_forward.1} parent=81 // pred_fallthru
          _
        // Predicated region
        $region129: #{lfq_forward.1} parent=81 // pred_check
          %p1681 = pneg %p236
        $region130: #{lfq_forward.1} parent=81 // pred_check_branch
          %1683 = sbr.rel (%p1681) target = $region132
        $region131: #{lfq_forward.1} parent=81 // pred_region
          _
        $region132: #{lfq_forward.1} parent=81 // pred_fallthru
          _
        // Predicated region
        $region133: #{lfq_forward.1} parent=81 // pred_check
          %p1684 = pneg %p262
        $region134: #{lfq_forward.1} parent=81 // pred_check_branch
          %1686 = sbr.rel (%p1684) target = $region136
        $region135: #{lfq_forward.1} parent=81 // pred_region
          _
        $region136: #{lfq_forward.1} parent=81 // pred_fallthru
          _
        // Predicated region
        $region137: #{lfq_forward.1} parent=81 // pred_check
          %p1687 = pneg %p288
        $region138: #{lfq_forward.1} parent=81 // pred_check_branch
          %1689 = sbr.rel (%p1687) target = $region140
        $region139: #{lfq_forward.1} parent=81 // pred_region
          _
        $region140: #{lfq_forward.1} parent=81 // pred_fallthru
          _
      $region82: #{lfq_forward.1} parent=5 // pred_fallthru
        _
      %p1690 = scmp.le.s32.totalorder 2, %s17
      // Predicated region
      $region141: #{lfq_forward.1} parent=5 // pred_check
        %p1691 = pneg %p1690
      $region142: #{lfq_forward.1} parent=5 // pred_check_branch
        %1693 = sbr.rel (%p1691) target = $region144
      $region143: #{lfq_forward.1} parent=5 // pred_region
        %s1694 = ssub.s32 %s17, 2
        // Predicated region
        $region145: #{lfq_forward.1} parent=143 // pred_check
          %p1695 = pneg %p214
        $region146: #{lfq_forward.1} parent=143 // pred_check_branch
          %1697 = sbr.rel (%p1695) target = $region148
        $region147: #{lfq_forward.1} parent=143 // pred_region
          %s1698 = sand.u32 %s199, 1
          %s1699 = sand.u32 %s199, 1
          %s1700 = smul.addr %s1699, 32
          %s1701 = scalar_lea.vmem [#allocation3], %s1700
        $region148: #{lfq_forward.1} parent=143 // pred_fallthru
          _
        // Predicated region
        $region149: #{lfq_forward.1} parent=143 // pred_check
          %p1702 = pneg %p242
        $region150: #{lfq_forward.1} parent=143 // pred_check_branch
          %1704 = sbr.rel (%p1702) target = $region152
        $region151: #{lfq_forward.1} parent=143 // pred_region
          %p1705 = scmp.lt.s32.totalorder %s28, 1
          %s1706 = scalar_select %p1705, %s28, 1
          %p1707 = scmp.lt.s32.totalorder %s29, 1
          %s1708 = scalar_select %p1707, %s29, 1
          %s1709 = smul.addr %s1706, 2
          %s1710 = sadd.s32 %s1708, %s1709
          %s1711 = scalar_lea.vmem %s8, %s1710
        $region152: #{lfq_forward.1} parent=143 // pred_fallthru
          _
        // Predicated region
        $region153: #{lfq_forward.1} parent=143 // pred_check
          %p1712 = pneg %p268
        $region154: #{lfq_forward.1} parent=143 // pred_check_branch
          %1714 = sbr.rel (%p1712) target = $region156
        $region155: #{lfq_forward.1} parent=143 // pred_region
          %p1715 = scmp.lt.s32.totalorder %s28, 1
          %s1716 = scalar_select %p1715, %s28, 1
          %s1717 = smul.addr %s1716, 32
          %s1718 = smul.addr %s1717, 8
          %s1719 = scalar_lea.vmem %s9, %s1718
        $region156: #{lfq_forward.1} parent=143 // pred_fallthru
          _
        // Predicated region
        $region157: #{lfq_forward.1} parent=143 // pred_check
          %p1720 = pneg %p294
        $region158: #{lfq_forward.1} parent=143 // pred_check_branch
          %1722 = sbr.rel (%p1720) target = $region160
        $region159: #{lfq_forward.1} parent=143 // pred_region
          %p1723 = scmp.lt.s32.totalorder %s28, 1
          %s1724 = scalar_select %p1723, %s28, 1
          %s1725 = scalar_lea.vmem %s10, %s1724
        $region160: #{lfq_forward.1} parent=143 // pred_fallthru
          _
      $region144: #{lfq_forward.1} parent=5 // pred_fallthru
        _
    $region6: #{lfq_forward.1} parent=1 // loop_footer
      %s21 = sadd.s32 1, %s17
    $region7: #{lfq_forward.1} parent=1 // loop_footer_branch
      %16 = sbr.rel target = $region3
    $region8: #{lfq_forward.1} parent=1 // loop_exit
      _

</llo_original>
